<compile_context>
chip_gen: v5e
topology: v5e:2x2
jax: 0.10.0
libtpu: 0.0.40
codegen_flags: <defaults>
</compile_context>

<pallas_src>
import functools

import jax
import jax.numpy as jnp
from jax import lax
from jax.experimental import pallas as pl
from jax.experimental.pallas import tpu as pltpu


# ----------------------------------------------------------------------------
# Fused kernel: masked super-kernel weight + 'same' conv (stride 1, dil 1,
# groups 1).  One grid step per batch element.
#   x_ref  : (1, C_in, (H+2*(pad+1))*W)  H-padded, row-flattened input
#   w_ref  : (C_out, K*K*C_in)           weight, (kh, kw, ci) lane order
#   mc_ref : (C_out, n_c)                disjoint channel masks (columns)
#   mk_ref : (n_k, K*K*C_in)             disjoint kernel-size masks (rows)
#   tc_ref : (1, n_c)   tk_ref : (1, n_k)   learnable thresholds
#   o_ref  : (1, C_out, H*W)             output (NCHW, spatial flattened)
#   p_ref  : (K*K*C_in, H*W) VMEM        im2col scratch
# ----------------------------------------------------------------------------
def _fused_kernel(x_ref, w_ref, mc_ref, mk_ref, tc_ref, tk_ref, o_ref, p_ref,
                  *, H, W, K, C_in, C_out, pad):
    f32 = jnp.float32
    hw = H * W

    def full_sum(v):  # staged full reduction -> (1, 1)
        return jnp.sum(jnp.sum(v, axis=1, keepdims=True), axis=0, keepdims=True)

    # ---- masked super-kernel weight --------------------------------------
    # Tiny; recomputed per grid step so the batch axis stays "parallel"
    # (megacore-safe: no cross-step scratch carry needed).
    w = w_ref[...].astype(f32)                       # (C_out, K*K*C_in)
    w2 = w * w
    ssq_co = jnp.sum(w2, axis=1, keepdims=True)      # (C_out, 1)   per out-ch
    ssq_tap = jnp.sum(w2, axis=0, keepdims=True)     # (1, K*K*C_in) per (tap,ci)

    # Forward value of ((norm>t).float()-sigmoid(norm-t)).detach()+sigmoid(.)
    # is exactly (norm > t).  Keep the sqrt: thresholds are learnable and may
    # be negative, so comparing squared norms would be wrong.
    mask_c = jnp.zeros((C_out, 1), f32)              # i0*(m0 + i1*(m1 + ...))
    for i in reversed(range(mc_ref.shape[1])):
        m_i = mc_ref[:, i:i + 1]                                   # (C_out, 1)
        norm = jnp.sqrt(full_sum(m_i * m_i * ssq_co))              # (1, 1)
        ind = (norm > tc_ref[:, i:i + 1]).astype(f32)              # (1, 1)
        mask_c = ind * (m_i + mask_c)

    mask_k = jnp.zeros((1, mk_ref.shape[1]), f32)
    for i in reversed(range(mk_ref.shape[0])):
        m_i = mk_ref[i:i + 1, :]                                   # (1, flat)
        norm = jnp.sqrt(full_sum(m_i * m_i * ssq_tap))             # (1, 1)
        ind = (norm > tk_ref[:, i:i + 1]).astype(f32)              # (1, 1)
        mask_k = ind * (m_i + mask_k)

    wm = w * mask_c * mask_k                         # (C_out, K*K*C_in)
    # TODO(synk): cast wm / patches to bfloat16 on v6e/v7x for ~2x MXU rate;
    # kept f32 here so the 1e-4 self-test tolerance holds.

    # ---- im2col into VMEM scratch: one lane-dense slice per tap ------------
    xf = x_ref[0].astype(f32)                        # (C_in, (H+2*(pad+1))*W)
    wcol = lax.broadcasted_iota(jnp.int32, (1, hw), 1) % W
    col_ok = []                                      # 7 masks, hoisted
    for kw in range(K):
        ws = wcol + (kw - pad)
        col_ok.append(jnp.logical_and(ws >= 0, ws < W))            # (1, H*W)

    for kh in range(K):
        for kw in range(K):
            # flat offset of tap (kh, kw); rows are padded by pad+1 at the top
            off = (kh + 1) * W + (kw - pad)
            patch = xf[:, off:off + hw]                            # (C_in, H*W)
            if kw != pad:      # zero columns that wrapped into adjacent rows
                patch = jnp.where(col_ok[kw], patch, 0.0)
            row = (kh * K + kw) * C_in
            p_ref[row:row + C_in, :] = patch

    # ---- single MXU matmul + lane-dense (C_out, H*W) store -----------------
    out = jnp.dot(wm, p_ref[...], preferred_element_type=jnp.float32)
    o_ref[...] = out[jnp.newaxis].astype(o_ref.dtype)


# ----------------------------------------------------------------------------
# Wrapper: compact mask packing, H-only padding, one pallas_call, no transposes
# ----------------------------------------------------------------------------
def super_kernel_threshold_conv(x_nchw, weight_oihw, masks_c, masks_k,
                                th_c, th_k, *, stride=1, dilation=1, groups=1):
    # TODO(synk): strided / dilated / grouped variants and the bias add are not
    # implemented (module defaults: stride=1, dilation=1, groups=1, bias=False).
    assert stride == 1 and dilation == 1 and groups == 1
    N, C_in, H, W = x_nchw.shape
    C_out, C_in_g, K, K2 = weight_oihw.shape
    assert K == K2 and C_in_g == C_in
    pad = (K - 1) // 2
    assert W >= pad, "kernel assumes W >= (K-1)//2"

    flat = K * K * C_in
    hw = H * W
    padf = (H + 2 * (pad + 1)) * W

    # weight flattened in (kh, kw, ci) lane order to match the im2col rows
    w_flat = jnp.transpose(weight_oihw, (0, 2, 3, 1)).reshape(C_out, flat)

    n_mc = masks_c.shape[0]
    n_mk = masks_k.shape[0]
    mc = jnp.transpose(masks_c.reshape(n_mc, C_out).astype(jnp.float32),
                       (1, 0))                                     # (C_out, n_c)
    mk = jnp.repeat(masks_k.reshape(n_mk, K * K).astype(jnp.float32),
                    C_in, axis=1)                                  # (n_k, flat)
    tc = th_c.reshape(1, n_mc).astype(jnp.float32)
    tk = th_k.reshape(1, n_mk).astype(jnp.float32)

    # 'same' padding: rows only (pad+1 each side so all tap offsets are >= 0);
    # the W boundary is masked inside the kernel.
    x_pad = jnp.pad(x_nchw, ((0, 0), (0, 0), (pad + 1, pad + 1), (0, 0)))
    x_flat = x_pad.reshape(N, C_in, padf)

    kern = functools.partial(_fused_kernel, H=H, W=W, K=K,
                             C_in=C_in, C_out=C_out, pad=pad)
    cost = pl.CostEstimate(
        flops=2 * N * hw * C_out * flat,
        transcendentals=0,
        bytes_accessed=4 * (x_flat.size + w_flat.size + mc.size + mk.size
                            + tc.size + tk.size + N * C_out * hw))

    out_flat = pl.pallas_call(
        kern,
        out_shape=jax.ShapeDtypeStruct((N, C_out, hw), x_nchw.dtype),
        grid=(N,),
        in_specs=[
            pl.BlockSpec((1, C_in, padf), lambda n: (n, 0, 0)),
            pl.BlockSpec((C_out, flat), lambda n: (0, 0)),
            pl.BlockSpec((C_out, n_mc), lambda n: (0, 0)),
            pl.BlockSpec((n_mk, flat), lambda n: (0, 0)),
            pl.BlockSpec((1, n_mc), lambda n: (0, 0)),
            pl.BlockSpec((1, n_mk), lambda n: (0, 0)),
        ],
        out_specs=pl.BlockSpec((1, C_out, hw), lambda n: (n, 0, 0)),
        scratch_shapes=[pltpu.VMEM((flat, hw), jnp.float32)],
        compiler_params=pltpu.CompilerParams(dimension_semantics=("parallel",)),
        cost_estimate=cost,
    )(x_flat, w_flat, mc, mk, tc, tk)

    # TODO(synk): for production H/W (and v7x's 64 MiB VMEM) add an H-strip
    # grid axis (output rows, haloed input reads) so per-step VMEM stays
    # bounded and N=1 still exposes a parallel axis of extent >= 2.
    return out_flat.reshape(N, C_out, H, W)


if __name__ == "__main__":
    key = jax.random.PRNGKey(0)
    kw_key, kx_key = jax.random.split(key)

    # small shapes consistent with the module
    N, C_in, H, W = 2, 4, 16, 16
    C_out = 8
    k_sizes = (3, 5, 7)
    c_multipliers = (0.5, 1.0)
    K = max(k_sizes)

    # nn.init.kaiming_normal_(weight, mode='fan_out'): std = sqrt(2 / (C_out*K*K))
    std = (2.0 / (C_out * K * K)) ** 0.5
    weight = jax.random.normal(kw_key, (C_out, C_in, K, K), jnp.float32) * std
    x = jax.random.normal(kx_key, (N, C_in, H, W), jnp.float32)

    # disjoint channel masks (as in __init__)
    c_out_list = [int(cm * C_out) for cm in sorted(c_multipliers)]
    masks_c_list = []
    for cs in c_out_list:
        m = jnp.ones((C_out,), jnp.float32).at[cs:].set(0.0)
        for prev in masks_c_list:
            m = m - prev
        masks_c_list.append(m)
    masks_c = jnp.stack(masks_c_list)                               # (2, C_out)

    # disjoint kernel-size masks (as in __init__)
    masks_k_list = []
    for k in sorted(k_sizes):
        dk = (K - k) // 2
        m = jnp.zeros((K, K), jnp.float32)
        if dk == 0:
            m = m + 1.0
        else:
            m = m.at[dk:K - dk, dk:K - dk].add(1.0)
        for prev in masks_k_list:
            m = m - prev
        masks_k_list.append(m)
    masks_k = jnp.stack(masks_k_list)                               # (3, K, K)

    # thresholds init to zero (nn.Parameter(torch.zeros(...)))
    th_c = jnp.zeros((masks_c.shape[0],), jnp.float32)
    th_k = jnp.zeros((masks_k.shape[0],), jnp.float32)

    out = super_kernel_threshold_conv(x, weight, masks_c, masks_k, th_c, th_k)
    out = jax.block_until_ready(out)

    # reference (plain JAX) check of the forward semantics
    mc_b = masks_c.reshape(-1, C_out, 1, 1, 1)
    mk_b = masks_k.reshape(-1, 1, 1, K, K)

    def ind(m, t):
        return (jnp.sqrt(jnp.sum((weight * m) ** 2)) > t).astype(jnp.float32)

    mask_c = ind(mc_b[0], th_c[0]) * (mc_b[0] + ind(mc_b[1], th_c[1]) * mc_b[1])
    mask_k = ind(mk_b[0], th_k[0]) * (
        mk_b[0] + ind(mk_b[1], th_k[1]) * (mk_b[1] + ind(mk_b[2], th_k[2]) * mk_b[2]))
    wm = weight * mask_c * mask_k
    p = (K - 1) // 2
    ref = jax.lax.conv_general_dilated(
        x, wm, window_strides=(1, 1), padding=((p, p), (p, p)),
        dimension_numbers=("NCHW", "OIHW", "NCHW"))

    assert out.shape == (N, C_out, H, W), out.shape
    assert jnp.allclose(out, ref, atol=1e-4, rtol=1e-4), \
        float(jnp.max(jnp.abs(out - ref)))
    print("KERNEL_OK")
</pallas_src>

<mosaic_0001>
module attributes {stable_mosaic.version = 11 : i64} {
  func.func @_fused_kernel(%arg0: i32, %arg1: memref<1x4x384xf32, #tpu.memory_space<vmem>>, %arg2: memref<8x196xf32, #tpu.memory_space<vmem>>, %arg3: memref<8x2xf32, #tpu.memory_space<vmem>>, %arg4: memref<3x196xf32, #tpu.memory_space<vmem>>, %arg5: memref<1x2xf32, #tpu.memory_space<vmem>>, %arg6: memref<1x3xf32, #tpu.memory_space<vmem>>, %arg7: memref<1x8x256xf32, #tpu.memory_space<vmem>>, %arg8: memref<196x256xf32, #tpu.memory_space<vmem>>) attributes {dimension_semantics = [#tpu.dimension_semantics<parallel>], iteration_bounds = array<i64: 2>, scalar_prefetch = 0 : i64, scratch_operands = 1 : i64, tpu.core_type = #tpu.core_type<tc>, window_params = [{transform_indices = @transform_0, window_bounds = array<i64: 1, 4, 384>}, {pipeline_mode = #tpu.pipeline_mode<synchronous>, transform_indices = @transform_1, window_bounds = array<i64: 8, 196>}, {pipeline_mode = #tpu.pipeline_mode<synchronous>, transform_indices = @transform_2, window_bounds = array<i64: 8, 2>}, {pipeline_mode = #tpu.pipeline_mode<synchronous>, transform_indices = @transform_3, window_bounds = array<i64: 3, 196>}, {pipeline_mode = #tpu.pipeline_mode<synchronous>, transform_indices = @transform_4, window_bounds = array<i64: 1, 2>}, {pipeline_mode = #tpu.pipeline_mode<synchronous>, transform_indices = @transform_5, window_bounds = array<i64: 1, 3>}, {transform_indices = @transform_6, window_bounds = array<i64: 1, 8, 256>}]} {
    %c0 = arith.constant 0 : index
    %c0_0 = arith.constant 0 : index
    %0 = vector.load %arg2[%c0, %c0_0] : memref<8x196xf32, #tpu.memory_space<vmem>>, vector<8x196xf32>
    %1 = arith.mulf %0, %0 : vector<8x196xf32>
    %cst = arith.constant dense<0.000000e+00> : vector<8xf32>
    %2 = vector.multi_reduction <add>, %1, %cst [1] : vector<8x196xf32> to vector<8xf32>
    %3 = vector.shape_cast %2 : vector<8xf32> to vector<8x1xf32>
    %cst_1 = arith.constant dense<0.000000e+00> : vector<196xf32>
    %4 = vector.multi_reduction <add>, %1, %cst_1 [0] : vector<8x196xf32> to vector<196xf32>
    %5 = vector.shape_cast %4 : vector<196xf32> to vector<1x196xf32>
    %cst_2 = arith.constant 0.000000e+00 : f32
    %6 = vector.broadcast %cst_2 : f32 to vector<8x1xf32>
    %c0_3 = arith.constant 0 : index
    %c1 = arith.constant 1 : index
    %7 = vector.load %arg3[%c0_3, %c1] : memref<8x2xf32, #tpu.memory_space<vmem>>, vector<8x1xf32>
    %8 = arith.mulf %7, %7 : vector<8x1xf32>
    %9 = arith.mulf %8, %3 : vector<8x1xf32>
    %cst_4 = arith.constant dense<0.000000e+00> : vector<8xf32>
    %10 = vector.multi_reduction <add>, %9, %cst_4 [1] : vector<8x1xf32> to vector<8xf32>
    %11 = vector.shape_cast %10 : vector<8xf32> to vector<8x1xf32>
    %cst_5 = arith.constant dense<0.000000e+00> : vector<1xf32>
    %12 = vector.multi_reduction <add>, %11, %cst_5 [0] : vector<8x1xf32> to vector<1xf32>
    %13 = vector.shape_cast %12 : vector<1xf32> to vector<1x1xf32>
    %14 = math.sqrt %13 : vector<1x1xf32>
    %c0_6 = arith.constant 0 : index
    %c1_7 = arith.constant 1 : index
    %15 = vector.load %arg5[%c0_6, %c1_7] : memref<1x2xf32, #tpu.memory_space<vmem>>, vector<1x1xf32>
    %16 = arith.cmpf ogt, %14, %15 : vector<1x1xf32>
    %17 = arith.extui %16 : vector<1x1xi1> to vector<1x1xi32>
    %18 = arith.sitofp %17 : vector<1x1xi32> to vector<1x1xf32>
    %19 = arith.addf %7, %6 : vector<8x1xf32>
    %20 = vector.broadcast %18 : vector<1x1xf32> to vector<8x1xf32>
    %21 = arith.mulf %20, %19 : vector<8x1xf32>
    %c0_8 = arith.constant 0 : index
    %c0_9 = arith.constant 0 : index
    %22 = vector.load %arg3[%c0_8, %c0_9] : memref<8x2xf32, #tpu.memory_space<vmem>>, vector<8x1xf32>
    %23 = arith.mulf %22, %22 : vector<8x1xf32>
    %24 = arith.mulf %23, %3 : vector<8x1xf32>
    %cst_10 = arith.constant dense<0.000000e+00> : vector<8xf32>
    %25 = vector.multi_reduction <add>, %24, %cst_10 [1] : vector<8x1xf32> to vector<8xf32>
    %26 = vector.shape_cast %25 : vector<8xf32> to vector<8x1xf32>
    %cst_11 = arith.constant dense<0.000000e+00> : vector<1xf32>
    %27 = vector.multi_reduction <add>, %26, %cst_11 [0] : vector<8x1xf32> to vector<1xf32>
    %28 = vector.shape_cast %27 : vector<1xf32> to vector<1x1xf32>
    %29 = math.sqrt %28 : vector<1x1xf32>
    %c0_12 = arith.constant 0 : index
    %c0_13 = arith.constant 0 : index
    %30 = vector.load %arg5[%c0_12, %c0_13] : memref<1x2xf32, #tpu.memory_space<vmem>>, vector<1x1xf32>
    %31 = arith.cmpf ogt, %29, %30 : vector<1x1xf32>
    %32 = arith.extui %31 : vector<1x1xi1> to vector<1x1xi32>
    %33 = arith.sitofp %32 : vector<1x1xi32> to vector<1x1xf32>
    %34 = arith.addf %22, %21 : vector<8x1xf32>
    %35 = vector.broadcast %33 : vector<1x1xf32> to vector<8x1xf32>
    %36 = arith.mulf %35, %34 : vector<8x1xf32>
    %cst_14 = arith.constant 0.000000e+00 : f32
    %37 = vector.broadcast %cst_14 : f32 to vector<1x196xf32>
    %c2 = arith.constant 2 : index
    %c0_15 = arith.constant 0 : index
    %38 = vector.load %arg4[%c2, %c0_15] : memref<3x196xf32, #tpu.memory_space<vmem>>, vector<1x196xf32>
    %39 = arith.mulf %38, %38 : vector<1x196xf32>
    %40 = arith.mulf %39, %5 : vector<1x196xf32>
    %cst_16 = arith.constant dense<0.000000e+00> : vector<1xf32>
    %41 = vector.multi_reduction <add>, %40, %cst_16 [1] : vector<1x196xf32> to vector<1xf32>
    %42 = vector.shape_cast %41 : vector<1xf32> to vector<1x1xf32>
    %cst_17 = arith.constant dense<0.000000e+00> : vector<1xf32>
    %43 = vector.multi_reduction <add>, %42, %cst_17 [0] : vector<1x1xf32> to vector<1xf32>
    %44 = vector.shape_cast %43 : vector<1xf32> to vector<1x1xf32>
    %45 = math.sqrt %44 : vector<1x1xf32>
    %c0_18 = arith.constant 0 : index
    %c2_19 = arith.constant 2 : index
    %46 = vector.load %arg6[%c0_18, %c2_19] : memref<1x3xf32, #tpu.memory_space<vmem>>, vector<1x1xf32>
    %47 = arith.cmpf ogt, %45, %46 : vector<1x1xf32>
    %48 = arith.extui %47 : vector<1x1xi1> to vector<1x1xi32>
    %49 = arith.sitofp %48 : vector<1x1xi32> to vector<1x1xf32>
    %50 = arith.addf %38, %37 : vector<1x196xf32>
    %51 = vector.broadcast %49 : vector<1x1xf32> to vector<1x196xf32>
    %52 = arith.mulf %51, %50 : vector<1x196xf32>
    %c1_20 = arith.constant 1 : index
    %c0_21 = arith.constant 0 : index
    %53 = vector.load %arg4[%c1_20, %c0_21] : memref<3x196xf32, #tpu.memory_space<vmem>>, vector<1x196xf32>
    %54 = arith.mulf %53, %53 : vector<1x196xf32>
    %55 = arith.mulf %54, %5 : vector<1x196xf32>
    %cst_22 = arith.constant dense<0.000000e+00> : vector<1xf32>
    %56 = vector.multi_reduction <add>, %55, %cst_22 [1] : vector<1x196xf32> to vector<1xf32>
    %57 = vector.shape_cast %56 : vector<1xf32> to vector<1x1xf32>
    %cst_23 = arith.constant dense<0.000000e+00> : vector<1xf32>
    %58 = vector.multi_reduction <add>, %57, %cst_23 [0] : vector<1x1xf32> to vector<1xf32>
    %59 = vector.shape_cast %58 : vector<1xf32> to vector<1x1xf32>
    %60 = math.sqrt %59 : vector<1x1xf32>
    %c0_24 = arith.constant 0 : index
    %c1_25 = arith.constant 1 : index
    %61 = vector.load %arg6[%c0_24, %c1_25] : memref<1x3xf32, #tpu.memory_space<vmem>>, vector<1x1xf32>
    %62 = arith.cmpf ogt, %60, %61 : vector<1x1xf32>
    %63 = arith.extui %62 : vector<1x1xi1> to vector<1x1xi32>
    %64 = arith.sitofp %63 : vector<1x1xi32> to vector<1x1xf32>
    %65 = arith.addf %53, %52 : vector<1x196xf32>
    %66 = vector.broadcast %64 : vector<1x1xf32> to vector<1x196xf32>
    %67 = arith.mulf %66, %65 : vector<1x196xf32>
    %c0_26 = arith.constant 0 : index
    %c0_27 = arith.constant 0 : index
    %68 = vector.load %arg4[%c0_26, %c0_27] : memref<3x196xf32, #tpu.memory_space<vmem>>, vector<1x196xf32>
    %69 = arith.mulf %68, %68 : vector<1x196xf32>
    %70 = arith.mulf %69, %5 : vector<1x196xf32>
    %cst_28 = arith.constant dense<0.000000e+00> : vector<1xf32>
    %71 = vector.multi_reduction <add>, %70, %cst_28 [1] : vector<1x196xf32> to vector<1xf32>
    %72 = vector.shape_cast %71 : vector<1xf32> to vector<1x1xf32>
    %cst_29 = arith.constant dense<0.000000e+00> : vector<1xf32>
    %73 = vector.multi_reduction <add>, %72, %cst_29 [0] : vector<1x1xf32> to vector<1xf32>
    %74 = vector.shape_cast %73 : vector<1xf32> to vector<1x1xf32>
    %75 = math.sqrt %74 : vector<1x1xf32>
    %c0_30 = arith.constant 0 : index
    %c0_31 = arith.constant 0 : index
    %76 = vector.load %arg6[%c0_30, %c0_31] : memref<1x3xf32, #tpu.memory_space<vmem>>, vector<1x1xf32>
    %77 = arith.cmpf ogt, %75, %76 : vector<1x1xf32>
    %78 = arith.extui %77 : vector<1x1xi1> to vector<1x1xi32>
    %79 = arith.sitofp %78 : vector<1x1xi32> to vector<1x1xf32>
    %80 = arith.addf %68, %67 : vector<1x196xf32>
    %81 = vector.broadcast %79 : vector<1x1xf32> to vector<1x196xf32>
    %82 = arith.mulf %81, %80 : vector<1x196xf32>
    %83 = vector.broadcast %36 : vector<8x1xf32> to vector<8x196xf32>
    %84 = arith.mulf %0, %83 : vector<8x196xf32>
    %85 = vector.broadcast %82 : vector<1x196xf32> to vector<8x196xf32>
    %86 = arith.mulf %84, %85 : vector<8x196xf32>
    %c0_32 = arith.constant 0 : index
    %c0_33 = arith.constant 0 : index
    %c0_34 = arith.constant 0 : index
    %87 = vector.load %arg1[%c0_32, %c0_33, %c0_34] : memref<1x4x384xf32, #tpu.memory_space<vmem>>, vector<1x4x384xf32>
    %88 = vector.shape_cast %87 : vector<1x4x384xf32> to vector<4x384xf32>
    %89 = tpu.iota {dimensions = array<i32: 1>} : vector<1x256xi32>
    %c16_i32 = arith.constant 16 : i32
    %c0_i32 = arith.constant 0 : i32
    %90 = arith.cmpi eq, %c16_i32, %c0_i32 : i32
    %c1_i32 = arith.constant 1 : i32
    %91 = arith.select %90, %c1_i32, %c16_i32 : i32
    %92 = vector.broadcast %91 : i32 to vector<1x256xi32>
    %93 = arith.remsi %89, %92 : vector<1x256xi32>
    %c0_i32_35 = arith.constant 0 : i32
    %94 = vector.broadcast %c0_i32_35 : i32 to vector<1x256xi32>
    %95 = arith.cmpi ne, %93, %94 : vector<1x256xi32>
    %c0_i32_36 = arith.constant 0 : i32
    %96 = vector.broadcast %c0_i32_36 : i32 to vector<1x256xi32>
    %97 = arith.cmpi slt, %93, %96 : vector<1x256xi32>
    %c0_i32_37 = arith.constant 0 : i32
    %98 = arith.cmpi slt, %91, %c0_i32_37 : i32
    %99 = vector.broadcast %98 : i1 to vector<1x256xi1>
    %100 = vector.broadcast %99 : vector<1x256xi1> to vector<1x256xi1>
    %101 = arith.xori %97, %100 : vector<1x256xi1>
    %102 = arith.andi %101, %95 : vector<1x256xi1>
    %103 = vector.broadcast %91 : i32 to vector<1x256xi32>
    %104 = arith.addi %93, %103 : vector<1x256xi32>
    %105 = arith.select %102, %104, %93 : vector<1x256xi1>, vector<1x256xi32>
    %c-3_i32 = arith.constant -3 : i32
    %106 = vector.broadcast %c-3_i32 : i32 to vector<1x256xi32>
    %107 = arith.addi %105, %106 : vector<1x256xi32>
    %c0_i32_38 = arith.constant 0 : i32
    %108 = vector.broadcast %c0_i32_38 : i32 to vector<1x256xi32>
    %109 = arith.cmpi sge, %107, %108 : vector<1x256xi32>
    %c16_i32_39 = arith.constant 16 : i32
    %110 = vector.broadcast %c16_i32_39 : i32 to vector<1x256xi32>
    %111 = arith.cmpi slt, %107, %110 : vector<1x256xi32>
    %112 = arith.andi %109, %111 : vector<1x256xi1>
    %c-2_i32 = arith.constant -2 : i32
    %113 = vector.broadcast %c-2_i32 : i32 to vector<1x256xi32>
    %114 = arith.addi %105, %113 : vector<1x256xi32>
    %c0_i32_40 = arith.constant 0 : i32
    %115 = vector.broadcast %c0_i32_40 : i32 to vector<1x256xi32>
    %116 = arith.cmpi sge, %114, %115 : vector<1x256xi32>
    %c16_i32_41 = arith.constant 16 : i32
    %117 = vector.broadcast %c16_i32_41 : i32 to vector<1x256xi32>
    %118 = arith.cmpi slt, %114, %117 : vector<1x256xi32>
    %119 = arith.andi %116, %118 : vector<1x256xi1>
    %c-1_i32 = arith.constant -1 : i32
    %120 = vector.broadcast %c-1_i32 : i32 to vector<1x256xi32>
    %121 = arith.addi %105, %120 : vector<1x256xi32>
    %c0_i32_42 = arith.constant 0 : i32
    %122 = vector.broadcast %c0_i32_42 : i32 to vector<1x256xi32>
    %123 = arith.cmpi sge, %121, %122 : vector<1x256xi32>
    %c16_i32_43 = arith.constant 16 : i32
    %124 = vector.broadcast %c16_i32_43 : i32 to vector<1x256xi32>
    %125 = arith.cmpi slt, %121, %124 : vector<1x256xi32>
    %126 = arith.andi %123, %125 : vector<1x256xi1>
    %c1_i32_44 = arith.constant 1 : i32
    %127 = vector.broadcast %c1_i32_44 : i32 to vector<1x256xi32>
    %128 = arith.addi %105, %127 : vector<1x256xi32>
    %c0_i32_45 = arith.constant 0 : i32
    %129 = vector.broadcast %c0_i32_45 : i32 to vector<1x256xi32>
    %130 = arith.cmpi sge, %128, %129 : vector<1x256xi32>
    %c16_i32_46 = arith.constant 16 : i32
    %131 = vector.broadcast %c16_i32_46 : i32 to vector<1x256xi32>
    %132 = arith.cmpi slt, %128, %131 : vector<1x256xi32>
    %133 = arith.andi %130, %132 : vector<1x256xi1>
    %c2_i32 = arith.constant 2 : i32
    %134 = vector.broadcast %c2_i32 : i32 to vector<1x256xi32>
    %135 = arith.addi %105, %134 : vector<1x256xi32>
    %c0_i32_47 = arith.constant 0 : i32
    %136 = vector.broadcast %c0_i32_47 : i32 to vector<1x256xi32>
    %137 = arith.cmpi sge, %135, %136 : vector<1x256xi32>
    %c16_i32_48 = arith.constant 16 : i32
    %138 = vector.broadcast %c16_i32_48 : i32 to vector<1x256xi32>
    %139 = arith.cmpi slt, %135, %138 : vector<1x256xi32>
    %140 = arith.andi %137, %139 : vector<1x256xi1>
    %c3_i32 = arith.constant 3 : i32
    %141 = vector.broadcast %c3_i32 : i32 to vector<1x256xi32>
    %142 = arith.addi %105, %141 : vector<1x256xi32>
    %c0_i32_49 = arith.constant 0 : i32
    %143 = vector.broadcast %c0_i32_49 : i32 to vector<1x256xi32>
    %144 = arith.cmpi sge, %142, %143 : vector<1x256xi32>
    %c16_i32_50 = arith.constant 16 : i32
    %145 = vector.broadcast %c16_i32_50 : i32 to vector<1x256xi32>
    %146 = arith.cmpi slt, %142, %145 : vector<1x256xi32>
    %147 = arith.andi %144, %146 : vector<1x256xi1>
    %148 = vector.extract_strided_slice %88 {offsets = [0, 13], sizes = [4, 256], strides = [1, 1]} : vector<4x384xf32> to vector<4x256xf32>
    %cst_51 = arith.constant 0.000000e+00 : f32
    %149 = vector.shape_cast %112 : vector<1x256xi1> to vector<1x256xi1>
    %150 = vector.broadcast %149 : vector<1x256xi1> to vector<4x256xi1>
    %151 = vector.broadcast %cst_51 : f32 to vector<4x256xf32>
    %152 = arith.select %150, %148, %151 : vector<4x256xi1>, vector<4x256xf32>
    %c0_52 = arith.constant 0 : index
    %c0_53 = arith.constant 0 : index
    %153 = vector.load %arg8[%c0_52, %c0_53] : memref<196x256xf32, #tpu.memory_space<vmem>>, vector<4x256xf32>
    tpu.vector_store %arg8[%c0_52, %c0_53], %152 {strides = array<i32>} : memref<196x256xf32, #tpu.memory_space<vmem>>, vector<4x256xf32>,
    %154 = vector.extract_strided_slice %88 {offsets = [0, 14], sizes = [4, 256], strides = [1, 1]} : vector<4x384xf32> to vector<4x256xf32>
    %cst_54 = arith.constant 0.000000e+00 : f32
    %155 = vector.shape_cast %119 : vector<1x256xi1> to vector<1x256xi1>
    %156 = vector.broadcast %155 : vector<1x256xi1> to vector<4x256xi1>
    %157 = vector.broadcast %cst_54 : f32 to vector<4x256xf32>
    %158 = arith.select %156, %154, %157 : vector<4x256xi1>, vector<4x256xf32>
    %c4 = arith.constant 4 : index
    %c0_55 = arith.constant 0 : index
    %159 = vector.load %arg8[%c4, %c0_55] : memref<196x256xf32, #tpu.memory_space<vmem>>, vector<4x256xf32>
    tpu.vector_store %arg8[%c4, %c0_55], %158 {strides = array<i32>} : memref<196x256xf32, #tpu.memory_space<vmem>>, vector<4x256xf32>,
    %160 = vector.extract_strided_slice %88 {offsets = [0, 15], sizes = [4, 256], strides = [1, 1]} : vector<4x384xf32> to vector<4x256xf32>
    %cst_56 = arith.constant 0.000000e+00 : f32
    %161 = vector.shape_cast %126 : vector<1x256xi1> to vector<1x256xi1>
    %162 = vector.broadcast %161 : vector<1x256xi1> to vector<4x256xi1>
    %163 = vector.broadcast %cst_56 : f32 to vector<4x256xf32>
    %164 = arith.select %162, %160, %163 : vector<4x256xi1>, vector<4x256xf32>
    %c8 = arith.constant 8 : index
    %c0_57 = arith.constant 0 : index
    %165 = vector.load %arg8[%c8, %c0_57] : memref<196x256xf32, #tpu.memory_space<vmem>>, vector<4x256xf32>
    tpu.vector_store %arg8[%c8, %c0_57], %164 {strides = array<i32>} : memref<196x256xf32, #tpu.memory_space<vmem>>, vector<4x256xf32>,
    %166 = vector.extract_strided_slice %88 {offsets = [0, 16], sizes = [4, 256], strides = [1, 1]} : vector<4x384xf32> to vector<4x256xf32>
    %c12 = arith.constant 12 : index
    %c0_58 = arith.constant 0 : index
    %167 = vector.load %arg8[%c12, %c0_58] : memref<196x256xf32, #tpu.memory_space<vmem>>, vector<4x256xf32>
    tpu.vector_store %arg8[%c12, %c0_58], %166 {strides = array<i32>} : memref<196x256xf32, #tpu.memory_space<vmem>>, vector<4x256xf32>,
    %168 = vector.extract_strided_slice %88 {offsets = [0, 17], sizes = [4, 256], strides = [1, 1]} : vector<4x384xf32> to vector<4x256xf32>
    %cst_59 = arith.constant 0.000000e+00 : f32
    %169 = vector.shape_cast %133 : vector<1x256xi1> to vector<1x256xi1>
    %170 = vector.broadcast %169 : vector<1x256xi1> to vector<4x256xi1>
    %171 = vector.broadcast %cst_59 : f32 to vector<4x256xf32>
    %172 = arith.select %170, %168, %171 : vector<4x256xi1>, vector<4x256xf32>
    %c16 = arith.constant 16 : index
    %c0_60 = arith.constant 0 : index
    %173 = vector.load %arg8[%c16, %c0_60] : memref<196x256xf32, #tpu.memory_space<vmem>>, vector<4x256xf32>
    tpu.vector_store %arg8[%c16, %c0_60], %172 {strides = array<i32>} : memref<196x256xf32, #tpu.memory_space<vmem>>, vector<4x256xf32>,
    %174 = vector.extract_strided_slice %88 {offsets = [0, 18], sizes = [4, 256], strides = [1, 1]} : vector<4x384xf32> to vector<4x256xf32>
    %cst_61 = arith.constant 0.000000e+00 : f32
    %175 = vector.shape_cast %140 : vector<1x256xi1> to vector<1x256xi1>
    %176 = vector.broadcast %175 : vector<1x256xi1> to vector<4x256xi1>
    %177 = vector.broadcast %cst_61 : f32 to vector<4x256xf32>
    %178 = arith.select %176, %174, %177 : vector<4x256xi1>, vector<4x256xf32>
    %c20 = arith.constant 20 : index
    %c0_62 = arith.constant 0 : index
    %179 = vector.load %arg8[%c20, %c0_62] : memref<196x256xf32, #tpu.memory_space<vmem>>, vector<4x256xf32>
    tpu.vector_store %arg8[%c20, %c0_62], %178 {strides = array<i32>} : memref<196x256xf32, #tpu.memory_space<vmem>>, vector<4x256xf32>,
    %180 = vector.extract_strided_slice %88 {offsets = [0, 19], sizes = [4, 256], strides = [1, 1]} : vector<4x384xf32> to vector<4x256xf32>
    %cst_63 = arith.constant 0.000000e+00 : f32
    %181 = vector.shape_cast %147 : vector<1x256xi1> to vector<1x256xi1>
    %182 = vector.broadcast %181 : vector<1x256xi1> to vector<4x256xi1>
    %183 = vector.broadcast %cst_63 : f32 to vector<4x256xf32>
    %184 = arith.select %182, %180, %183 : vector<4x256xi1>, vector<4x256xf32>
    %c24 = arith.constant 24 : index
    %c0_64 = arith.constant 0 : index
    %185 = vector.load %arg8[%c24, %c0_64] : memref<196x256xf32, #tpu.memory_space<vmem>>, vector<4x256xf32>
    tpu.vector_store %arg8[%c24, %c0_64], %184 {strides = array<i32>} : memref<196x256xf32, #tpu.memory_space<vmem>>, vector<4x256xf32>,
    %186 = vector.extract_strided_slice %88 {offsets = [0, 29], sizes = [4, 256], strides = [1, 1]} : vector<4x384xf32> to vector<4x256xf32>
    %cst_65 = arith.constant 0.000000e+00 : f32
    %187 = vector.shape_cast %112 : vector<1x256xi1> to vector<1x256xi1>
    %188 = vector.broadcast %187 : vector<1x256xi1> to vector<4x256xi1>
    %189 = vector.broadcast %cst_65 : f32 to vector<4x256xf32>
    %190 = arith.select %188, %186, %189 : vector<4x256xi1>, vector<4x256xf32>
    %c28 = arith.constant 28 : index
    %c0_66 = arith.constant 0 : index
    %191 = vector.load %arg8[%c28, %c0_66] : memref<196x256xf32, #tpu.memory_space<vmem>>, vector<4x256xf32>
    tpu.vector_store %arg8[%c28, %c0_66], %190 {strides = array<i32>} : memref<196x256xf32, #tpu.memory_space<vmem>>, vector<4x256xf32>,
    %192 = vector.extract_strided_slice %88 {offsets = [0, 30], sizes = [4, 256], strides = [1, 1]} : vector<4x384xf32> to vector<4x256xf32>
    %cst_67 = arith.constant 0.000000e+00 : f32
    %193 = vector.shape_cast %119 : vector<1x256xi1> to vector<1x256xi1>
    %194 = vector.broadcast %193 : vector<1x256xi1> to vector<4x256xi1>
    %195 = vector.broadcast %cst_67 : f32 to vector<4x256xf32>
    %196 = arith.select %194, %192, %195 : vector<4x256xi1>, vector<4x256xf32>
    %c32 = arith.constant 32 : index
    %c0_68 = arith.constant 0 : index
    %197 = vector.load %arg8[%c32, %c0_68] : memref<196x256xf32, #tpu.memory_space<vmem>>, vector<4x256xf32>
    tpu.vector_store %arg8[%c32, %c0_68], %196 {strides = array<i32>} : memref<196x256xf32, #tpu.memory_space<vmem>>, vector<4x256xf32>,
    %198 = vector.extract_strided_slice %88 {offsets = [0, 31], sizes = [4, 256], strides = [1, 1]} : vector<4x384xf32> to vector<4x256xf32>
    %cst_69 = arith.constant 0.000000e+00 : f32
    %199 = vector.shape_cast %126 : vector<1x256xi1> to vector<1x256xi1>
    %200 = vector.broadcast %199 : vector<1x256xi1> to vector<4x256xi1>
    %201 = vector.broadcast %cst_69 : f32 to vector<4x256xf32>
    %202 = arith.select %200, %198, %201 : vector<4x256xi1>, vector<4x256xf32>
    %c36 = arith.constant 36 : index
    %c0_70 = arith.constant 0 : index
    %203 = vector.load %arg8[%c36, %c0_70] : memref<196x256xf32, #tpu.memory_space<vmem>>, vector<4x256xf32>
    tpu.vector_store %arg8[%c36, %c0_70], %202 {strides = array<i32>} : memref<196x256xf32, #tpu.memory_space<vmem>>, vector<4x256xf32>,
    %204 = vector.extract_strided_slice %88 {offsets = [0, 32], sizes = [4, 256], strides = [1, 1]} : vector<4x384xf32> to vector<4x256xf32>
    %c40 = arith.constant 40 : index
    %c0_71 = arith.constant 0 : index
    %205 = vector.load %arg8[%c40, %c0_71] : memref<196x256xf32, #tpu.memory_space<vmem>>, vector<4x256xf32>
    tpu.vector_store %arg8[%c40, %c0_71], %204 {strides = array<i32>} : memref<196x256xf32, #tpu.memory_space<vmem>>, vector<4x256xf32>,
    %206 = vector.extract_strided_slice %88 {offsets = [0, 33], sizes = [4, 256], strides = [1, 1]} : vector<4x384xf32> to vector<4x256xf32>
    %cst_72 = arith.constant 0.000000e+00 : f32
    %207 = vector.shape_cast %133 : vector<1x256xi1> to vector<1x256xi1>
    %208 = vector.broadcast %207 : vector<1x256xi1> to vector<4x256xi1>
    %209 = vector.broadcast %cst_72 : f32 to vector<4x256xf32>
    %210 = arith.select %208, %206, %209 : vector<4x256xi1>, vector<4x256xf32>
    %c44 = arith.constant 44 : index
    %c0_73 = arith.constant 0 : index
    %211 = vector.load %arg8[%c44, %c0_73] : memref<196x256xf32, #tpu.memory_space<vmem>>, vector<4x256xf32>
    tpu.vector_store %arg8[%c44, %c0_73], %210 {strides = array<i32>} : memref<196x256xf32, #tpu.memory_space<vmem>>, vector<4x256xf32>,
    %212 = vector.extract_strided_slice %88 {offsets = [0, 34], sizes = [4, 256], strides = [1, 1]} : vector<4x384xf32> to vector<4x256xf32>
    %cst_74 = arith.constant 0.000000e+00 : f32
    %213 = vector.shape_cast %140 : vector<1x256xi1> to vector<1x256xi1>
    %214 = vector.broadcast %213 : vector<1x256xi1> to vector<4x256xi1>
    %215 = vector.broadcast %cst_74 : f32 to vector<4x256xf32>
    %216 = arith.select %214, %212, %215 : vector<4x256xi1>, vector<4x256xf32>
    %c48 = arith.constant 48 : index
    %c0_75 = arith.constant 0 : index
    %217 = vector.load %arg8[%c48, %c0_75] : memref<196x256xf32, #tpu.memory_space<vmem>>, vector<4x256xf32>
    tpu.vector_store %arg8[%c48, %c0_75], %216 {strides = array<i32>} : memref<196x256xf32, #tpu.memory_space<vmem>>, vector<4x256xf32>,
    %218 = vector.extract_strided_slice %88 {offsets = [0, 35], sizes = [4, 256], strides = [1, 1]} : vector<4x384xf32> to vector<4x256xf32>
    %cst_76 = arith.constant 0.000000e+00 : f32
    %219 = vector.shape_cast %147 : vector<1x256xi1> to vector<1x256xi1>
    %220 = vector.broadcast %219 : vector<1x256xi1> to vector<4x256xi1>
    %221 = vector.broadcast %cst_76 : f32 to vector<4x256xf32>
    %222 = arith.select %220, %218, %221 : vector<4x256xi1>, vector<4x256xf32>
    %c52 = arith.constant 52 : index
    %c0_77 = arith.constant 0 : index
    %223 = vector.load %arg8[%c52, %c0_77] : memref<196x256xf32, #tpu.memory_space<vmem>>, vector<4x256xf32>
    tpu.vector_store %arg8[%c52, %c0_77], %222 {strides = array<i32>} : memref<196x256xf32, #tpu.memory_space<vmem>>, vector<4x256xf32>,
    %224 = vector.extract_strided_slice %88 {offsets = [0, 45], sizes = [4, 256], strides = [1, 1]} : vector<4x384xf32> to vector<4x256xf32>
    %cst_78 = arith.constant 0.000000e+00 : f32
    %225 = vector.shape_cast %112 : vector<1x256xi1> to vector<1x256xi1>
    %226 = vector.broadcast %225 : vector<1x256xi1> to vector<4x256xi1>
    %227 = vector.broadcast %cst_78 : f32 to vector<4x256xf32>
    %228 = arith.select %226, %224, %227 : vector<4x256xi1>, vector<4x256xf32>
    %c56 = arith.constant 56 : index
    %c0_79 = arith.constant 0 : index
    %229 = vector.load %arg8[%c56, %c0_79] : memref<196x256xf32, #tpu.memory_space<vmem>>, vector<4x256xf32>
    tpu.vector_store %arg8[%c56, %c0_79], %228 {strides = array<i32>} : memref<196x256xf32, #tpu.memory_space<vmem>>, vector<4x256xf32>,
    %230 = vector.extract_strided_slice %88 {offsets = [0, 46], sizes = [4, 256], strides = [1, 1]} : vector<4x384xf32> to vector<4x256xf32>
    %cst_80 = arith.constant 0.000000e+00 : f32
    %231 = vector.shape_cast %119 : vector<1x256xi1> to vector<1x256xi1>
    %232 = vector.broadcast %231 : vector<1x256xi1> to vector<4x256xi1>
    %233 = vector.broadcast %cst_80 : f32 to vector<4x256xf32>
    %234 = arith.select %232, %230, %233 : vector<4x256xi1>, vector<4x256xf32>
    %c60 = arith.constant 60 : index
    %c0_81 = arith.constant 0 : index
    %235 = vector.load %arg8[%c60, %c0_81] : memref<196x256xf32, #tpu.memory_space<vmem>>, vector<4x256xf32>
    tpu.vector_store %arg8[%c60, %c0_81], %234 {strides = array<i32>} : memref<196x256xf32, #tpu.memory_space<vmem>>, vector<4x256xf32>,
    %236 = vector.extract_strided_slice %88 {offsets = [0, 47], sizes = [4, 256], strides = [1, 1]} : vector<4x384xf32> to vector<4x256xf32>
    %cst_82 = arith.constant 0.000000e+00 : f32
    %237 = vector.shape_cast %126 : vector<1x256xi1> to vector<1x256xi1>
    %238 = vector.broadcast %237 : vector<1x256xi1> to vector<4x256xi1>
    %239 = vector.broadcast %cst_82 : f32 to vector<4x256xf32>
    %240 = arith.select %238, %236, %239 : vector<4x256xi1>, vector<4x256xf32>
    %c64 = arith.constant 64 : index
    %c0_83 = arith.constant 0 : index
    %241 = vector.load %arg8[%c64, %c0_83] : memref<196x256xf32, #tpu.memory_space<vmem>>, vector<4x256xf32>
    tpu.vector_store %arg8[%c64, %c0_83], %240 {strides = array<i32>} : memref<196x256xf32, #tpu.memory_space<vmem>>, vector<4x256xf32>,
    %242 = vector.extract_strided_slice %88 {offsets = [0, 48], sizes = [4, 256], strides = [1, 1]} : vector<4x384xf32> to vector<4x256xf32>
    %c68 = arith.constant 68 : index
    %c0_84 = arith.constant 0 : index
    %243 = vector.load %arg8[%c68, %c0_84] : memref<196x256xf32, #tpu.memory_space<vmem>>, vector<4x256xf32>
    tpu.vector_store %arg8[%c68, %c0_84], %242 {strides = array<i32>} : memref<196x256xf32, #tpu.memory_space<vmem>>, vector<4x256xf32>,
    %244 = vector.extract_strided_slice %88 {offsets = [0, 49], sizes = [4, 256], strides = [1, 1]} : vector<4x384xf32> to vector<4x256xf32>
    %cst_85 = arith.constant 0.000000e+00 : f32
    %245 = vector.shape_cast %133 : vector<1x256xi1> to vector<1x256xi1>
    %246 = vector.broadcast %245 : vector<1x256xi1> to vector<4x256xi1>
    %247 = vector.broadcast %cst_85 : f32 to vector<4x256xf32>
    %248 = arith.select %246, %244, %247 : vector<4x256xi1>, vector<4x256xf32>
    %c72 = arith.constant 72 : index
    %c0_86 = arith.constant 0 : index
    %249 = vector.load %arg8[%c72, %c0_86] : memref<196x256xf32, #tpu.memory_space<vmem>>, vector<4x256xf32>
    tpu.vector_store %arg8[%c72, %c0_86], %248 {strides = array<i32>} : memref<196x256xf32, #tpu.memory_space<vmem>>, vector<4x256xf32>,
    %250 = vector.extract_strided_slice %88 {offsets = [0, 50], sizes = [4, 256], strides = [1, 1]} : vector<4x384xf32> to vector<4x256xf32>
    %cst_87 = arith.constant 0.000000e+00 : f32
    %251 = vector.shape_cast %140 : vector<1x256xi1> to vector<1x256xi1>
    %252 = vector.broadcast %251 : vector<1x256xi1> to vector<4x256xi1>
    %253 = vector.broadcast %cst_87 : f32 to vector<4x256xf32>
    %254 = arith.select %252, %250, %253 : vector<4x256xi1>, vector<4x256xf32>
    %c76 = arith.constant 76 : index
    %c0_88 = arith.constant 0 : index
    %255 = vector.load %arg8[%c76, %c0_88] : memref<196x256xf32, #tpu.memory_space<vmem>>, vector<4x256xf32>
    tpu.vector_store %arg8[%c76, %c0_88], %254 {strides = array<i32>} : memref<196x256xf32, #tpu.memory_space<vmem>>, vector<4x256xf32>,
    %256 = vector.extract_strided_slice %88 {offsets = [0, 51], sizes = [4, 256], strides = [1, 1]} : vector<4x384xf32> to vector<4x256xf32>
    %cst_89 = arith.constant 0.000000e+00 : f32
    %257 = vector.shape_cast %147 : vector<1x256xi1> to vector<1x256xi1>
    %258 = vector.broadcast %257 : vector<1x256xi1> to vector<4x256xi1>
    %259 = vector.broadcast %cst_89 : f32 to vector<4x256xf32>
    %260 = arith.select %258, %256, %259 : vector<4x256xi1>, vector<4x256xf32>
    %c80 = arith.constant 80 : index
    %c0_90 = arith.constant 0 : index
    %261 = vector.load %arg8[%c80, %c0_90] : memref<196x256xf32, #tpu.memory_space<vmem>>, vector<4x256xf32>
    tpu.vector_store %arg8[%c80, %c0_90], %260 {strides = array<i32>} : memref<196x256xf32, #tpu.memory_space<vmem>>, vector<4x256xf32>,
    %262 = vector.extract_strided_slice %88 {offsets = [0, 61], sizes = [4, 256], strides = [1, 1]} : vector<4x384xf32> to vector<4x256xf32>
    %cst_91 = arith.constant 0.000000e+00 : f32
    %263 = vector.shape_cast %112 : vector<1x256xi1> to vector<1x256xi1>
    %264 = vector.broadcast %263 : vector<1x256xi1> to vector<4x256xi1>
    %265 = vector.broadcast %cst_91 : f32 to vector<4x256xf32>
    %266 = arith.select %264, %262, %265 : vector<4x256xi1>, vector<4x256xf32>
    %c84 = arith.constant 84 : index
    %c0_92 = arith.constant 0 : index
    %267 = vector.load %arg8[%c84, %c0_92] : memref<196x256xf32, #tpu.memory_space<vmem>>, vector<4x256xf32>
    tpu.vector_store %arg8[%c84, %c0_92], %266 {strides = array<i32>} : memref<196x256xf32, #tpu.memory_space<vmem>>, vector<4x256xf32>,
    %268 = vector.extract_strided_slice %88 {offsets = [0, 62], sizes = [4, 256], strides = [1, 1]} : vector<4x384xf32> to vector<4x256xf32>
    %cst_93 = arith.constant 0.000000e+00 : f32
    %269 = vector.shape_cast %119 : vector<1x256xi1> to vector<1x256xi1>
    %270 = vector.broadcast %269 : vector<1x256xi1> to vector<4x256xi1>
    %271 = vector.broadcast %cst_93 : f32 to vector<4x256xf32>
    %272 = arith.select %270, %268, %271 : vector<4x256xi1>, vector<4x256xf32>
    %c88 = arith.constant 88 : index
    %c0_94 = arith.constant 0 : index
    %273 = vector.load %arg8[%c88, %c0_94] : memref<196x256xf32, #tpu.memory_space<vmem>>, vector<4x256xf32>
    tpu.vector_store %arg8[%c88, %c0_94], %272 {strides = array<i32>} : memref<196x256xf32, #tpu.memory_space<vmem>>, vector<4x256xf32>,
    %274 = vector.extract_strided_slice %88 {offsets = [0, 63], sizes = [4, 256], strides = [1, 1]} : vector<4x384xf32> to vector<4x256xf32>
    %cst_95 = arith.constant 0.000000e+00 : f32
    %275 = vector.shape_cast %126 : vector<1x256xi1> to vector<1x256xi1>
    %276 = vector.broadcast %275 : vector<1x256xi1> to vector<4x256xi1>
    %277 = vector.broadcast %cst_95 : f32 to vector<4x256xf32>
    %278 = arith.select %276, %274, %277 : vector<4x256xi1>, vector<4x256xf32>
    %c92 = arith.constant 92 : index
    %c0_96 = arith.constant 0 : index
    %279 = vector.load %arg8[%c92, %c0_96] : memref<196x256xf32, #tpu.memory_space<vmem>>, vector<4x256xf32>
    tpu.vector_store %arg8[%c92, %c0_96], %278 {strides = array<i32>} : memref<196x256xf32, #tpu.memory_space<vmem>>, vector<4x256xf32>,
    %280 = vector.extract_strided_slice %88 {offsets = [0, 64], sizes = [4, 256], strides = [1, 1]} : vector<4x384xf32> to vector<4x256xf32>
    %c96 = arith.constant 96 : index
    %c0_97 = arith.constant 0 : index
    %281 = vector.load %arg8[%c96, %c0_97] : memref<196x256xf32, #tpu.memory_space<vmem>>, vector<4x256xf32>
    tpu.vector_store %arg8[%c96, %c0_97], %280 {strides = array<i32>} : memref<196x256xf32, #tpu.memory_space<vmem>>, vector<4x256xf32>,
    %282 = vector.extract_strided_slice %88 {offsets = [0, 65], sizes = [4, 256], strides = [1, 1]} : vector<4x384xf32> to vector<4x256xf32>
    %cst_98 = arith.constant 0.000000e+00 : f32
    %283 = vector.shape_cast %133 : vector<1x256xi1> to vector<1x256xi1>
    %284 = vector.broadcast %283 : vector<1x256xi1> to vector<4x256xi1>
    %285 = vector.broadcast %cst_98 : f32 to vector<4x256xf32>
    %286 = arith.select %284, %282, %285 : vector<4x256xi1>, vector<4x256xf32>
    %c100 = arith.constant 100 : index
    %c0_99 = arith.constant 0 : index
    %287 = vector.load %arg8[%c100, %c0_99] : memref<196x256xf32, #tpu.memory_space<vmem>>, vector<4x256xf32>
    tpu.vector_store %arg8[%c100, %c0_99], %286 {strides = array<i32>} : memref<196x256xf32, #tpu.memory_space<vmem>>, vector<4x256xf32>,
    %288 = vector.extract_strided_slice %88 {offsets = [0, 66], sizes = [4, 256], strides = [1, 1]} : vector<4x384xf32> to vector<4x256xf32>
    %cst_100 = arith.constant 0.000000e+00 : f32
    %289 = vector.shape_cast %140 : vector<1x256xi1> to vector<1x256xi1>
    %290 = vector.broadcast %289 : vector<1x256xi1> to vector<4x256xi1>
    %291 = vector.broadcast %cst_100 : f32 to vector<4x256xf32>
    %292 = arith.select %290, %288, %291 : vector<4x256xi1>, vector<4x256xf32>
    %c104 = arith.constant 104 : index
    %c0_101 = arith.constant 0 : index
    %293 = vector.load %arg8[%c104, %c0_101] : memref<196x256xf32, #tpu.memory_space<vmem>>, vector<4x256xf32>
    tpu.vector_store %arg8[%c104, %c0_101], %292 {strides = array<i32>} : memref<196x256xf32, #tpu.memory_space<vmem>>, vector<4x256xf32>,
    %294 = vector.extract_strided_slice %88 {offsets = [0, 67], sizes = [4, 256], strides = [1, 1]} : vector<4x384xf32> to vector<4x256xf32>
    %cst_102 = arith.constant 0.000000e+00 : f32
    %295 = vector.shape_cast %147 : vector<1x256xi1> to vector<1x256xi1>
    %296 = vector.broadcast %295 : vector<1x256xi1> to vector<4x256xi1>
    %297 = vector.broadcast %cst_102 : f32 to vector<4x256xf32>
    %298 = arith.select %296, %294, %297 : vector<4x256xi1>, vector<4x256xf32>
    %c108 = arith.constant 108 : index
    %c0_103 = arith.constant 0 : index
    %299 = vector.load %arg8[%c108, %c0_103] : memref<196x256xf32, #tpu.memory_space<vmem>>, vector<4x256xf32>
    tpu.vector_store %arg8[%c108, %c0_103], %298 {strides = array<i32>} : memref<196x256xf32, #tpu.memory_space<vmem>>, vector<4x256xf32>,
    %300 = vector.extract_strided_slice %88 {offsets = [0, 77], sizes = [4, 256], strides = [1, 1]} : vector<4x384xf32> to vector<4x256xf32>
    %cst_104 = arith.constant 0.000000e+00 : f32
    %301 = vector.shape_cast %112 : vector<1x256xi1> to vector<1x256xi1>
    %302 = vector.broadcast %301 : vector<1x256xi1> to vector<4x256xi1>
    %303 = vector.broadcast %cst_104 : f32 to vector<4x256xf32>
    %304 = arith.select %302, %300, %303 : vector<4x256xi1>, vector<4x256xf32>
    %c112 = arith.constant 112 : index
    %c0_105 = arith.constant 0 : index
    %305 = vector.load %arg8[%c112, %c0_105] : memref<196x256xf32, #tpu.memory_space<vmem>>, vector<4x256xf32>
    tpu.vector_store %arg8[%c112, %c0_105], %304 {strides = array<i32>} : memref<196x256xf32, #tpu.memory_space<vmem>>, vector<4x256xf32>,
    %306 = vector.extract_strided_slice %88 {offsets = [0, 78], sizes = [4, 256], strides = [1, 1]} : vector<4x384xf32> to vector<4x256xf32>
    %cst_106 = arith.constant 0.000000e+00 : f32
    %307 = vector.shape_cast %119 : vector<1x256xi1> to vector<1x256xi1>
    %308 = vector.broadcast %307 : vector<1x256xi1> to vector<4x256xi1>
    %309 = vector.broadcast %cst_106 : f32 to vector<4x256xf32>
    %310 = arith.select %308, %306, %309 : vector<4x256xi1>, vector<4x256xf32>
    %c116 = arith.constant 116 : index
    %c0_107 = arith.constant 0 : index
    %311 = vector.load %arg8[%c116, %c0_107] : memref<196x256xf32, #tpu.memory_space<vmem>>, vector<4x256xf32>
    tpu.vector_store %arg8[%c116, %c0_107], %310 {strides = array<i32>} : memref<196x256xf32, #tpu.memory_space<vmem>>, vector<4x256xf32>,
    %312 = vector.extract_strided_slice %88 {offsets = [0, 79], sizes = [4, 256], strides = [1, 1]} : vector<4x384xf32> to vector<4x256xf32>
    %cst_108 = arith.constant 0.000000e+00 : f32
    %313 = vector.shape_cast %126 : vector<1x256xi1> to vector<1x256xi1>
    %314 = vector.broadcast %313 : vector<1x256xi1> to vector<4x256xi1>
    %315 = vector.broadcast %cst_108 : f32 to vector<4x256xf32>
    %316 = arith.select %314, %312, %315 : vector<4x256xi1>, vector<4x256xf32>
    %c120 = arith.constant 120 : index
    %c0_109 = arith.constant 0 : index
    %317 = vector.load %arg8[%c120, %c0_109] : memref<196x256xf32, #tpu.memory_space<vmem>>, vector<4x256xf32>
    tpu.vector_store %arg8[%c120, %c0_109], %316 {strides = array<i32>} : memref<196x256xf32, #tpu.memory_space<vmem>>, vector<4x256xf32>,
    %318 = vector.extract_strided_slice %88 {offsets = [0, 80], sizes = [4, 256], strides = [1, 1]} : vector<4x384xf32> to vector<4x256xf32>
    %c124 = arith.constant 124 : index
    %c0_110 = arith.constant 0 : index
    %319 = vector.load %arg8[%c124, %c0_110] : memref<196x256xf32, #tpu.memory_space<vmem>>, vector<4x256xf32>
    tpu.vector_store %arg8[%c124, %c0_110], %318 {strides = array<i32>} : memref<196x256xf32, #tpu.memory_space<vmem>>, vector<4x256xf32>,
    %320 = vector.extract_strided_slice %88 {offsets = [0, 81], sizes = [4, 256], strides = [1, 1]} : vector<4x384xf32> to vector<4x256xf32>
    %cst_111 = arith.constant 0.000000e+00 : f32
    %321 = vector.shape_cast %133 : vector<1x256xi1> to vector<1x256xi1>
    %322 = vector.broadcast %321 : vector<1x256xi1> to vector<4x256xi1>
    %323 = vector.broadcast %cst_111 : f32 to vector<4x256xf32>
    %324 = arith.select %322, %320, %323 : vector<4x256xi1>, vector<4x256xf32>
    %c128 = arith.constant 128 : index
    %c0_112 = arith.constant 0 : index
    %325 = vector.load %arg8[%c128, %c0_112] : memref<196x256xf32, #tpu.memory_space<vmem>>, vector<4x256xf32>
    tpu.vector_store %arg8[%c128, %c0_112], %324 {strides = array<i32>} : memref<196x256xf32, #tpu.memory_space<vmem>>, vector<4x256xf32>,
    %326 = vector.extract_strided_slice %88 {offsets = [0, 82], sizes = [4, 256], strides = [1, 1]} : vector<4x384xf32> to vector<4x256xf32>
    %cst_113 = arith.constant 0.000000e+00 : f32
    %327 = vector.shape_cast %140 : vector<1x256xi1> to vector<1x256xi1>
    %328 = vector.broadcast %327 : vector<1x256xi1> to vector<4x256xi1>
    %329 = vector.broadcast %cst_113 : f32 to vector<4x256xf32>
    %330 = arith.select %328, %326, %329 : vector<4x256xi1>, vector<4x256xf32>
    %c132 = arith.constant 132 : index
    %c0_114 = arith.constant 0 : index
    %331 = vector.load %arg8[%c132, %c0_114] : memref<196x256xf32, #tpu.memory_space<vmem>>, vector<4x256xf32>
    tpu.vector_store %arg8[%c132, %c0_114], %330 {strides = array<i32>} : memref<196x256xf32, #tpu.memory_space<vmem>>, vector<4x256xf32>,
    %332 = vector.extract_strided_slice %88 {offsets = [0, 83], sizes = [4, 256], strides = [1, 1]} : vector<4x384xf32> to vector<4x256xf32>
    %cst_115 = arith.constant 0.000000e+00 : f32
    %333 = vector.shape_cast %147 : vector<1x256xi1> to vector<1x256xi1>
    %334 = vector.broadcast %333 : vector<1x256xi1> to vector<4x256xi1>
    %335 = vector.broadcast %cst_115 : f32 to vector<4x256xf32>
    %336 = arith.select %334, %332, %335 : vector<4x256xi1>, vector<4x256xf32>
    %c136 = arith.constant 136 : index
    %c0_116 = arith.constant 0 : index
    %337 = vector.load %arg8[%c136, %c0_116] : memref<196x256xf32, #tpu.memory_space<vmem>>, vector<4x256xf32>
    tpu.vector_store %arg8[%c136, %c0_116], %336 {strides = array<i32>} : memref<196x256xf32, #tpu.memory_space<vmem>>, vector<4x256xf32>,
    %338 = vector.extract_strided_slice %88 {offsets = [0, 93], sizes = [4, 256], strides = [1, 1]} : vector<4x384xf32> to vector<4x256xf32>
    %cst_117 = arith.constant 0.000000e+00 : f32
    %339 = vector.shape_cast %112 : vector<1x256xi1> to vector<1x256xi1>
    %340 = vector.broadcast %339 : vector<1x256xi1> to vector<4x256xi1>
    %341 = vector.broadcast %cst_117 : f32 to vector<4x256xf32>
    %342 = arith.select %340, %338, %341 : vector<4x256xi1>, vector<4x256xf32>
    %c140 = arith.constant 140 : index
    %c0_118 = arith.constant 0 : index
    %343 = vector.load %arg8[%c140, %c0_118] : memref<196x256xf32, #tpu.memory_space<vmem>>, vector<4x256xf32>
    tpu.vector_store %arg8[%c140, %c0_118], %342 {strides = array<i32>} : memref<196x256xf32, #tpu.memory_space<vmem>>, vector<4x256xf32>,
    %344 = vector.extract_strided_slice %88 {offsets = [0, 94], sizes = [4, 256], strides = [1, 1]} : vector<4x384xf32> to vector<4x256xf32>
    %cst_119 = arith.constant 0.000000e+00 : f32
    %345 = vector.shape_cast %119 : vector<1x256xi1> to vector<1x256xi1>
    %346 = vector.broadcast %345 : vector<1x256xi1> to vector<4x256xi1>
    %347 = vector.broadcast %cst_119 : f32 to vector<4x256xf32>
    %348 = arith.select %346, %344, %347 : vector<4x256xi1>, vector<4x256xf32>
    %c144 = arith.constant 144 : index
    %c0_120 = arith.constant 0 : index
    %349 = vector.load %arg8[%c144, %c0_120] : memref<196x256xf32, #tpu.memory_space<vmem>>, vector<4x256xf32>
    tpu.vector_store %arg8[%c144, %c0_120], %348 {strides = array<i32>} : memref<196x256xf32, #tpu.memory_space<vmem>>, vector<4x256xf32>,
    %350 = vector.extract_strided_slice %88 {offsets = [0, 95], sizes = [4, 256], strides = [1, 1]} : vector<4x384xf32> to vector<4x256xf32>
    %cst_121 = arith.constant 0.000000e+00 : f32
    %351 = vector.shape_cast %126 : vector<1x256xi1> to vector<1x256xi1>
    %352 = vector.broadcast %351 : vector<1x256xi1> to vector<4x256xi1>
    %353 = vector.broadcast %cst_121 : f32 to vector<4x256xf32>
    %354 = arith.select %352, %350, %353 : vector<4x256xi1>, vector<4x256xf32>
    %c148 = arith.constant 148 : index
    %c0_122 = arith.constant 0 : index
    %355 = vector.load %arg8[%c148, %c0_122] : memref<196x256xf32, #tpu.memory_space<vmem>>, vector<4x256xf32>
    tpu.vector_store %arg8[%c148, %c0_122], %354 {strides = array<i32>} : memref<196x256xf32, #tpu.memory_space<vmem>>, vector<4x256xf32>,
    %356 = vector.extract_strided_slice %88 {offsets = [0, 96], sizes = [4, 256], strides = [1, 1]} : vector<4x384xf32> to vector<4x256xf32>
    %c152 = arith.constant 152 : index
    %c0_123 = arith.constant 0 : index
    %357 = vector.load %arg8[%c152, %c0_123] : memref<196x256xf32, #tpu.memory_space<vmem>>, vector<4x256xf32>
    tpu.vector_store %arg8[%c152, %c0_123], %356 {strides = array<i32>} : memref<196x256xf32, #tpu.memory_space<vmem>>, vector<4x256xf32>,
    %358 = vector.extract_strided_slice %88 {offsets = [0, 97], sizes = [4, 256], strides = [1, 1]} : vector<4x384xf32> to vector<4x256xf32>
    %cst_124 = arith.constant 0.000000e+00 : f32
    %359 = vector.shape_cast %133 : vector<1x256xi1> to vector<1x256xi1>
    %360 = vector.broadcast %359 : vector<1x256xi1> to vector<4x256xi1>
    %361 = vector.broadcast %cst_124 : f32 to vector<4x256xf32>
    %362 = arith.select %360, %358, %361 : vector<4x256xi1>, vector<4x256xf32>
    %c156 = arith.constant 156 : index
    %c0_125 = arith.constant 0 : index
    %363 = vector.load %arg8[%c156, %c0_125] : memref<196x256xf32, #tpu.memory_space<vmem>>, vector<4x256xf32>
    tpu.vector_store %arg8[%c156, %c0_125], %362 {strides = array<i32>} : memref<196x256xf32, #tpu.memory_space<vmem>>, vector<4x256xf32>,
    %364 = vector.extract_strided_slice %88 {offsets = [0, 98], sizes = [4, 256], strides = [1, 1]} : vector<4x384xf32> to vector<4x256xf32>
    %cst_126 = arith.constant 0.000000e+00 : f32
    %365 = vector.shape_cast %140 : vector<1x256xi1> to vector<1x256xi1>
    %366 = vector.broadcast %365 : vector<1x256xi1> to vector<4x256xi1>
    %367 = vector.broadcast %cst_126 : f32 to vector<4x256xf32>
    %368 = arith.select %366, %364, %367 : vector<4x256xi1>, vector<4x256xf32>
    %c160 = arith.constant 160 : index
    %c0_127 = arith.constant 0 : index
    %369 = vector.load %arg8[%c160, %c0_127] : memref<196x256xf32, #tpu.memory_space<vmem>>, vector<4x256xf32>
    tpu.vector_store %arg8[%c160, %c0_127], %368 {strides = array<i32>} : memref<196x256xf32, #tpu.memory_space<vmem>>, vector<4x256xf32>,
    %370 = vector.extract_strided_slice %88 {offsets = [0, 99], sizes = [4, 256], strides = [1, 1]} : vector<4x384xf32> to vector<4x256xf32>
    %cst_128 = arith.constant 0.000000e+00 : f32
    %371 = vector.shape_cast %147 : vector<1x256xi1> to vector<1x256xi1>
    %372 = vector.broadcast %371 : vector<1x256xi1> to vector<4x256xi1>
    %373 = vector.broadcast %cst_128 : f32 to vector<4x256xf32>
    %374 = arith.select %372, %370, %373 : vector<4x256xi1>, vector<4x256xf32>
    %c164 = arith.constant 164 : index
    %c0_129 = arith.constant 0 : index
    %375 = vector.load %arg8[%c164, %c0_129] : memref<196x256xf32, #tpu.memory_space<vmem>>, vector<4x256xf32>
    tpu.vector_store %arg8[%c164, %c0_129], %374 {strides = array<i32>} : memref<196x256xf32, #tpu.memory_space<vmem>>, vector<4x256xf32>,
    %376 = vector.extract_strided_slice %88 {offsets = [0, 109], sizes = [4, 256], strides = [1, 1]} : vector<4x384xf32> to vector<4x256xf32>
    %cst_130 = arith.constant 0.000000e+00 : f32
    %377 = vector.shape_cast %112 : vector<1x256xi1> to vector<1x256xi1>
    %378 = vector.broadcast %377 : vector<1x256xi1> to vector<4x256xi1>
    %379 = vector.broadcast %cst_130 : f32 to vector<4x256xf32>
    %380 = arith.select %378, %376, %379 : vector<4x256xi1>, vector<4x256xf32>
    %c168 = arith.constant 168 : index
    %c0_131 = arith.constant 0 : index
    %381 = vector.load %arg8[%c168, %c0_131] : memref<196x256xf32, #tpu.memory_space<vmem>>, vector<4x256xf32>
    tpu.vector_store %arg8[%c168, %c0_131], %380 {strides = array<i32>} : memref<196x256xf32, #tpu.memory_space<vmem>>, vector<4x256xf32>,
    %382 = vector.extract_strided_slice %88 {offsets = [0, 110], sizes = [4, 256], strides = [1, 1]} : vector<4x384xf32> to vector<4x256xf32>
    %cst_132 = arith.constant 0.000000e+00 : f32
    %383 = vector.shape_cast %119 : vector<1x256xi1> to vector<1x256xi1>
    %384 = vector.broadcast %383 : vector<1x256xi1> to vector<4x256xi1>
    %385 = vector.broadcast %cst_132 : f32 to vector<4x256xf32>
    %386 = arith.select %384, %382, %385 : vector<4x256xi1>, vector<4x256xf32>
    %c172 = arith.constant 172 : index
    %c0_133 = arith.constant 0 : index
    %387 = vector.load %arg8[%c172, %c0_133] : memref<196x256xf32, #tpu.memory_space<vmem>>, vector<4x256xf32>
    tpu.vector_store %arg8[%c172, %c0_133], %386 {strides = array<i32>} : memref<196x256xf32, #tpu.memory_space<vmem>>, vector<4x256xf32>,
    %388 = vector.extract_strided_slice %88 {offsets = [0, 111], sizes = [4, 256], strides = [1, 1]} : vector<4x384xf32> to vector<4x256xf32>
    %cst_134 = arith.constant 0.000000e+00 : f32
    %389 = vector.shape_cast %126 : vector<1x256xi1> to vector<1x256xi1>
    %390 = vector.broadcast %389 : vector<1x256xi1> to vector<4x256xi1>
    %391 = vector.broadcast %cst_134 : f32 to vector<4x256xf32>
    %392 = arith.select %390, %388, %391 : vector<4x256xi1>, vector<4x256xf32>
    %c176 = arith.constant 176 : index
    %c0_135 = arith.constant 0 : index
    %393 = vector.load %arg8[%c176, %c0_135] : memref<196x256xf32, #tpu.memory_space<vmem>>, vector<4x256xf32>
    tpu.vector_store %arg8[%c176, %c0_135], %392 {strides = array<i32>} : memref<196x256xf32, #tpu.memory_space<vmem>>, vector<4x256xf32>,
    %394 = vector.extract_strided_slice %88 {offsets = [0, 112], sizes = [4, 256], strides = [1, 1]} : vector<4x384xf32> to vector<4x256xf32>
    %c180 = arith.constant 180 : index
    %c0_136 = arith.constant 0 : index
    %395 = vector.load %arg8[%c180, %c0_136] : memref<196x256xf32, #tpu.memory_space<vmem>>, vector<4x256xf32>
    tpu.vector_store %arg8[%c180, %c0_136], %394 {strides = array<i32>} : memref<196x256xf32, #tpu.memory_space<vmem>>, vector<4x256xf32>,
    %396 = vector.extract_strided_slice %88 {offsets = [0, 113], sizes = [4, 256], strides = [1, 1]} : vector<4x384xf32> to vector<4x256xf32>
    %cst_137 = arith.constant 0.000000e+00 : f32
    %397 = vector.shape_cast %133 : vector<1x256xi1> to vector<1x256xi1>
    %398 = vector.broadcast %397 : vector<1x256xi1> to vector<4x256xi1>
    %399 = vector.broadcast %cst_137 : f32 to vector<4x256xf32>
    %400 = arith.select %398, %396, %399 : vector<4x256xi1>, vector<4x256xf32>
    %c184 = arith.constant 184 : index
    %c0_138 = arith.constant 0 : index
    %401 = vector.load %arg8[%c184, %c0_138] : memref<196x256xf32, #tpu.memory_space<vmem>>, vector<4x256xf32>
    tpu.vector_store %arg8[%c184, %c0_138], %400 {strides = array<i32>} : memref<196x256xf32, #tpu.memory_space<vmem>>, vector<4x256xf32>,
    %402 = vector.extract_strided_slice %88 {offsets = [0, 114], sizes = [4, 256], strides = [1, 1]} : vector<4x384xf32> to vector<4x256xf32>
    %cst_139 = arith.constant 0.000000e+00 : f32
    %403 = vector.shape_cast %140 : vector<1x256xi1> to vector<1x256xi1>
    %404 = vector.broadcast %403 : vector<1x256xi1> to vector<4x256xi1>
    %405 = vector.broadcast %cst_139 : f32 to vector<4x256xf32>
    %406 = arith.select %404, %402, %405 : vector<4x256xi1>, vector<4x256xf32>
    %c188 = arith.constant 188 : index
    %c0_140 = arith.constant 0 : index
    %407 = vector.load %arg8[%c188, %c0_140] : memref<196x256xf32, #tpu.memory_space<vmem>>, vector<4x256xf32>
    tpu.vector_store %arg8[%c188, %c0_140], %406 {strides = array<i32>} : memref<196x256xf32, #tpu.memory_space<vmem>>, vector<4x256xf32>,
    %408 = vector.extract_strided_slice %88 {offsets = [0, 115], sizes = [4, 256], strides = [1, 1]} : vector<4x384xf32> to vector<4x256xf32>
    %cst_141 = arith.constant 0.000000e+00 : f32
    %409 = vector.shape_cast %147 : vector<1x256xi1> to vector<1x256xi1>
    %410 = vector.broadcast %409 : vector<1x256xi1> to vector<4x256xi1>
    %411 = vector.broadcast %cst_141 : f32 to vector<4x256xf32>
    %412 = arith.select %410, %408, %411 : vector<4x256xi1>, vector<4x256xf32>
    %c192 = arith.constant 192 : index
    %c0_142 = arith.constant 0 : index
    %413 = vector.load %arg8[%c192, %c0_142] : memref<196x256xf32, #tpu.memory_space<vmem>>, vector<4x256xf32>
    tpu.vector_store %arg8[%c192, %c0_142], %412 {strides = array<i32>} : memref<196x256xf32, #tpu.memory_space<vmem>>, vector<4x256xf32>,
    %c0_143 = arith.constant 0 : index
    %c0_144 = arith.constant 0 : index
    %414 = vector.load %arg8[%c0_143, %c0_144] : memref<196x256xf32, #tpu.memory_space<vmem>>, vector<196x256xf32>
    %cst_145 = arith.constant dense<0.000000e+00> : vector<8x256xf32>
    %415 = tpu.matmul %86, %414, %cst_145 {dimension_numbers = #tpu.dot_dimension_numbers<[1], [0], [0], [1], [0, 0, 1, 1], [], []>} : vector<8x196xf32>, vector<196x256xf32>, vector<8x256xf32> -> vector<8x256xf32>
    %416 = vector.shape_cast %415 : vector<8x256xf32> to vector<1x8x256xf32>
    %c0_146 = arith.constant 0 : index
    %c0_147 = arith.constant 0 : index
    %c0_148 = arith.constant 0 : index
    %417 = vector.load %arg7[%c0_146, %c0_147, %c0_148] : memref<1x8x256xf32, #tpu.memory_space<vmem>>, vector<1x8x256xf32>
    tpu.vector_store %arg7[%c0_146, %c0_147, %c0_148], %416 {strides = array<i32>} : memref<1x8x256xf32, #tpu.memory_space<vmem>>, vector<1x8x256xf32>,
    return
  }
  func.func @transform_0(%arg0: i32) -> (i32, i32, i32) {
    %c0_i32 = arith.constant 0 : i32
    %c0_i32_0 = arith.constant 0 : i32
    %c0_i32_1 = arith.constant 0 : i32
    return %arg0, %c0_i32, %c0_i32_0 : i32, i32, i32
  }
  func.func @transform_1(%arg0: i32) -> (i32, i32) {
    %c0_i32 = arith.constant 0 : i32
    %c0_i32_0 = arith.constant 0 : i32
    %c0_i32_1 = arith.constant 0 : i32
    return %c0_i32, %c0_i32_0 : i32, i32
  }
  func.func @transform_2(%arg0: i32) -> (i32, i32) {
    %c0_i32 = arith.constant 0 : i32
    %c0_i32_0 = arith.constant 0 : i32
    %c0_i32_1 = arith.constant 0 : i32
    return %c0_i32, %c0_i32_0 : i32, i32
  }
  func.func @transform_3(%arg0: i32) -> (i32, i32) {
    %c0_i32 = arith.constant 0 : i32
    %c0_i32_0 = arith.constant 0 : i32
    %c0_i32_1 = arith.constant 0 : i32
    return %c0_i32, %c0_i32_0 : i32, i32
  }
  func.func @transform_4(%arg0: i32) -> (i32, i32) {
    %c0_i32 = arith.constant 0 : i32
    %c0_i32_0 = arith.constant 0 : i32
    %c0_i32_1 = arith.constant 0 : i32
    return %c0_i32, %c0_i32_0 : i32, i32
  }
  func.func @transform_5(%arg0: i32) -> (i32, i32) {
    %c0_i32 = arith.constant 0 : i32
    %c0_i32_0 = arith.constant 0 : i32
    %c0_i32_1 = arith.constant 0 : i32
    return %c0_i32, %c0_i32_0 : i32, i32
  }
  func.func @transform_6(%arg0: i32) -> (i32, i32, i32) {
    %c0_i32 = arith.constant 0 : i32
    %c0_i32_0 = arith.constant 0 : i32
    %c0_i32_1 = arith.constant 0 : i32
    return %arg0, %c0_i32, %c0_i32_0 : i32, i32, i32
  }
}

</mosaic_0001>

<llo_original>
// kernel: tpu_custom_call.1
$region0: #{tpu_custom_call.1}
  #allocation0 [shape = 'u32[]', space=smem, size = 0x4, offset = 0x4, fixed_abs, tag = 'smem constant byte address 0x4 - core index']
  #allocation1 [shape = 'u32[72,128]{1,0:T(1,128)}', space=vmem, size = 0x9000, scoped, tag = 'internal scratch']
  #allocation2 [shape = 'f32[196,256]{1,0:T(8,128)}', space=vmem, size = 0x32000, scoped, tag = 'scratch operand']
  %s0 = inlined_call_operand.hbm [shape: f32[2,4,384], index: 0, kind: input, shape index: {}]
  %s1 = inlined_call_operand.hbm [shape: f32[8,196], index: 1, kind: input, shape index: {}]
  %s2 = inlined_call_operand.vmem [shape: f32[8,2], index: 2, kind: input, shape index: {}]
  %s3 = inlined_call_operand.vmem [shape: f32[3,196], index: 3, kind: input, shape index: {}]
  %s4 = inlined_call_operand.vmem [shape: f32[1,2], index: 4, kind: input, shape index: {}]
  %s5 = inlined_call_operand.vmem [shape: f32[1,3], index: 5, kind: input, shape index: {}]
  %s6 = inlined_call_operand.hbm [shape: f32[2,8,256], index: 6, kind: output, shape index: {}]
  %s7 = sld [smem:[#allocation0]]
  $region65: #{tpu_custom_call.1} parent=0
    _
  %s9 = ssub.s32 1, %s7
  %s10 = scalar_select 0, %s9, %s7
  $region1: #{tpu_custom_call.1} parent=0
    #allocation3 [shape = 'u8[12288]{0}', space=vmem, size = 0x3000, scoped, tag = 'input window, operand 0']
    #allocation4 [shape = 's32[2]{0}', space=sflag, size = 0x8, scoped, tag = 'scoped memory for tpu_custom_call.1']
    #allocation5 [shape = 's32[2]{0}', space=sflag, size = 0x8, scoped, tag = 'scoped memory for tpu_custom_call.1']
    #allocation6 [shape = 'u8[8192]{0}', space=vmem, size = 0x2000, scoped, tag = 'input window, operand 1, single buffered']
    #allocation7 [shape = 's32[1]{0}', space=sflag, size = 0x4, scoped, tag = 'scoped memory for tpu_custom_call.1']
    #allocation8 [shape = 'u8[16384]{0}', space=vmem, size = 0x4000, scoped, tag = 'output window, operand 0']
    %11 = vsyncpa [#allocation4], 0
    %s12 = scalar_lea.sflag [#allocation4], 1
    %13 = vsyncpa %s12, 0
    %14 = vsyncpa [#allocation7], 0
    %15 = vsyncpa [#allocation5], 0
    %s16 = scalar_lea.sflag [#allocation5], 1
    %17 = vsyncpa %s16, 0
    loop: start=0, step=1, limit=4
    $region2: #{tpu_custom_call.1} parent=1 // loop_pre_header
      _
    $region3: #{tpu_custom_call.1} parent=1 // loop_header
      %s19 = sphi 0, %s23
      %p20 = scmp.ge.s32.totalorder %s19, 4
      %s29 = sphi 0, %s31
      %s32 = sphi 0, %s29
      %s33 = sphi 0, %s32
      %s49 = sphi 0, %s33
      %s53 = sphi 0, %s53
      %s55 = sphi 0, %s53
      %s56 = sphi 0, %s55
      %s70 = sphi 0, %s56
      %s74 = sphi 0, %s74
      %s76 = sphi 0, %s74
      %s77 = sphi 0, %s76
      %s91 = sphi 0, %s77
      %s95 = sphi 0, %s95
      %s97 = sphi 0, %s95
      %s98 = sphi 0, %s97
      %s112 = sphi 0, %s98
      %s116 = sphi 0, %s116
      %s118 = sphi 0, %s116
      %s119 = sphi 0, %s118
      %s133 = sphi 0, %s119
      %s137 = sphi 0, %s137
      %s139 = sphi 0, %s137
      %s140 = sphi 0, %s139
      %s154 = sphi 0, %s140
      %s160 = sphi 0, %s162
      %s163 = sphi 0, %s160
      %s164 = sphi 0, %s163
      %s180 = sphi 0, %s164
    $region4: #{tpu_custom_call.1} parent=1 // loop_header_branch
      %22 = sbr.rel (%p20) target = $region8
    $region5: #{tpu_custom_call.1} parent=1 // loop_body
      %s24 = ssub.s32 %s19, 1
      %s25 = ssub.s32 %s19, 2
      %s26 = sadd.s32 %s19, 1
      %s27 = ssub.s32 %s19, %s26
      %p28 = scmp.eq.s32.totalorder %s27, 0
      %s30 = sadd.s32 %s29, 1
      %s31 = scalar_select %p28, %s29, %s30
      %p34 = pneg %p28
      %p35 = scmp.eq.s32.totalorder %s19, 1
      %p36 = por %p34, %p35
      %p37 = scmp.ne.s32.totalorder %s29, %s32
      %p38 = scmp.eq.s32.totalorder %s19, 0
      %p39 = por %p37, %p38
      %p40 = scmp.ne.s32.totalorder %s29, %s32
      %p41 = scmp.eq.s32.totalorder %s24, 1
      %p42 = por %p40, %p41
      %p43 = scmp.ne.s32.totalorder %s32, %s33
      %p44 = scmp.eq.s32.totalorder %s24, 0
      %p45 = por %p43, %p44
      %p46 = scmp.ne.s32.totalorder %s32, %s33
      %p47 = scmp.eq.s32.totalorder %s25, 1
      %p48 = por %p46, %p47
      %p50 = scmp.ne.s32.totalorder %s33, %s49
      %p51 = scmp.eq.s32.totalorder %s25, 0
      %p52 = por %p50, %p51
      %s54 = sadd.s32 %s53, 1
      %p57 = scmp.eq.s32.totalorder %s19, 1
      %p58 = scmp.ne.s32.totalorder %s53, %s55
      %p59 = scmp.eq.s32.totalorder %s19, 0
      %p60 = por %p58, %p59
      %p61 = scmp.ne.s32.totalorder %s53, %s55
      %p62 = scmp.eq.s32.totalorder %s24, 1
      %p63 = por %p61, %p62
      %p64 = scmp.ne.s32.totalorder %s55, %s56
      %p65 = scmp.eq.s32.totalorder %s24, 0
      %p66 = por %p64, %p65
      %p67 = scmp.ne.s32.totalorder %s55, %s56
      %p68 = scmp.eq.s32.totalorder %s25, 1
      %p69 = por %p67, %p68
      %p71 = scmp.ne.s32.totalorder %s56, %s70
      %p72 = scmp.eq.s32.totalorder %s25, 0
      %p73 = por %p71, %p72
      %s75 = sadd.s32 %s74, 1
      %p78 = scmp.eq.s32.totalorder %s19, 1
      %p79 = scmp.ne.s32.totalorder %s74, %s76
      %p80 = scmp.eq.s32.totalorder %s19, 0
      %p81 = por %p79, %p80
      %p82 = scmp.ne.s32.totalorder %s74, %s76
      %p83 = scmp.eq.s32.totalorder %s24, 1
      %p84 = por %p82, %p83
      %p85 = scmp.ne.s32.totalorder %s76, %s77
      %p86 = scmp.eq.s32.totalorder %s24, 0
      %p87 = por %p85, %p86
      %p88 = scmp.ne.s32.totalorder %s76, %s77
      %p89 = scmp.eq.s32.totalorder %s25, 1
      %p90 = por %p88, %p89
      %p92 = scmp.ne.s32.totalorder %s77, %s91
      %p93 = scmp.eq.s32.totalorder %s25, 0
      %p94 = por %p92, %p93
      %s96 = sadd.s32 %s95, 1
      %p99 = scmp.eq.s32.totalorder %s19, 1
      %p100 = scmp.ne.s32.totalorder %s95, %s97
      %p101 = scmp.eq.s32.totalorder %s19, 0
      %p102 = por %p100, %p101
      %p103 = scmp.ne.s32.totalorder %s95, %s97
      %p104 = scmp.eq.s32.totalorder %s24, 1
      %p105 = por %p103, %p104
      %p106 = scmp.ne.s32.totalorder %s97, %s98
      %p107 = scmp.eq.s32.totalorder %s24, 0
      %p108 = por %p106, %p107
      %p109 = scmp.ne.s32.totalorder %s97, %s98
      %p110 = scmp.eq.s32.totalorder %s25, 1
      %p111 = por %p109, %p110
      %p113 = scmp.ne.s32.totalorder %s98, %s112
      %p114 = scmp.eq.s32.totalorder %s25, 0
      %p115 = por %p113, %p114
      %s117 = sadd.s32 %s116, 1
      %p120 = scmp.eq.s32.totalorder %s19, 1
      %p121 = scmp.ne.s32.totalorder %s116, %s118
      %p122 = scmp.eq.s32.totalorder %s19, 0
      %p123 = por %p121, %p122
      %p124 = scmp.ne.s32.totalorder %s116, %s118
      %p125 = scmp.eq.s32.totalorder %s24, 1
      %p126 = por %p124, %p125
      %p127 = scmp.ne.s32.totalorder %s118, %s119
      %p128 = scmp.eq.s32.totalorder %s24, 0
      %p129 = por %p127, %p128
      %p130 = scmp.ne.s32.totalorder %s118, %s119
      %p131 = scmp.eq.s32.totalorder %s25, 1
      %p132 = por %p130, %p131
      %p134 = scmp.ne.s32.totalorder %s119, %s133
      %p135 = scmp.eq.s32.totalorder %s25, 0
      %p136 = por %p134, %p135
      %s138 = sadd.s32 %s137, 1
      %p141 = scmp.eq.s32.totalorder %s19, 1
      %p142 = scmp.ne.s32.totalorder %s137, %s139
      %p143 = scmp.eq.s32.totalorder %s19, 0
      %p144 = por %p142, %p143
      %p145 = scmp.ne.s32.totalorder %s137, %s139
      %p146 = scmp.eq.s32.totalorder %s24, 1
      %p147 = por %p145, %p146
      %p148 = scmp.ne.s32.totalorder %s139, %s140
      %p149 = scmp.eq.s32.totalorder %s24, 0
      %p150 = por %p148, %p149
      %p151 = scmp.ne.s32.totalorder %s139, %s140
      %p152 = scmp.eq.s32.totalorder %s25, 1
      %p153 = por %p151, %p152
      %p155 = scmp.ne.s32.totalorder %s140, %s154
      %p156 = scmp.eq.s32.totalorder %s25, 0
      %p157 = por %p155, %p156
      %s158 = ssub.s32 %s19, %s26
      %p159 = scmp.eq.s32.totalorder %s158, 0
      %s161 = sadd.s32 %s160, 1
      %s162 = scalar_select %p159, %s160, %s161
      %p165 = pneg %p159
      %p166 = scmp.eq.s32.totalorder %s19, 1
      %p167 = por %p165, %p166
      %p168 = scmp.ne.s32.totalorder %s160, %s163
      %p169 = scmp.eq.s32.totalorder %s19, 0
      %p170 = por %p168, %p169
      %p171 = scmp.ne.s32.totalorder %s160, %s163
      %p172 = scmp.eq.s32.totalorder %s24, 1
      %p173 = por %p171, %p172
      %p174 = scmp.ne.s32.totalorder %s163, %s164
      %p175 = scmp.eq.s32.totalorder %s24, 0
      %p176 = por %p174, %p175
      %p177 = scmp.ne.s32.totalorder %s163, %s164
      %p178 = scmp.eq.s32.totalorder %s25, 1
      %p179 = por %p177, %p178
      %p181 = scmp.ne.s32.totalorder %s164, %s180
      %p182 = scmp.eq.s32.totalorder %s25, 0
      %p183 = por %p181, %p182
      %p184 = scmp.le.s32.totalorder 1, %s19
      %p185 = scmp.lt.s32.totalorder %s19, 3
      %p186 = pnand %p184, %p185
      %p187 = pneg %p186
      // Predicated region
      $region9: #{tpu_custom_call.1} parent=5 // pred_check
        _
      $region10: #{tpu_custom_call.1} parent=5 // pred_check_branch
        %189 = sbr.rel (%p186) target = $region12
      $region11: #{tpu_custom_call.1} parent=5 // pred_region
        %s190 = ssub.s32 %s19, 1
        // Predicated region
        $region13: #{tpu_custom_call.1} parent=11 // pred_check
          %p191 = pneg %p66
        $region14: #{tpu_custom_call.1} parent=11 // pred_check_branch
          %193 = sbr.rel (%p191) target = $region16
        $region15: #{tpu_custom_call.1} parent=11 // pred_region
          %195 = vsyncadd [#allocation7], 0
          %s197 = sshll.u32 %s1, 4
          %s198 = int_to_ptr.hbm [resolvable:$true] %s197
          %s199 = sshll.u32 [#allocation6], 4
          %s200 = int_to_ptr.vmem [resolvable:$true] %s199
          %202 = dma.hbm_to_vmem [thread:$0]  %s198, 256, %s200, [#allocation7]
        $region16: #{tpu_custom_call.1} parent=11 // pred_fallthru
          _
        // Predicated region
        $region17: #{tpu_custom_call.1} parent=11 // pred_check
          %p203 = pneg %p87
        $region18: #{tpu_custom_call.1} parent=11 // pred_check_branch
          %205 = sbr.rel (%p203) target = $region20
        $region19: #{tpu_custom_call.1} parent=11 // pred_region
          _
        $region20: #{tpu_custom_call.1} parent=11 // pred_fallthru
          _
        // Predicated region
        $region21: #{tpu_custom_call.1} parent=11 // pred_check
          %p206 = pneg %p108
        $region22: #{tpu_custom_call.1} parent=11 // pred_check_branch
          %208 = sbr.rel (%p206) target = $region24
        $region23: #{tpu_custom_call.1} parent=11 // pred_region
          _
        $region24: #{tpu_custom_call.1} parent=11 // pred_fallthru
          _
        // Predicated region
        $region25: #{tpu_custom_call.1} parent=11 // pred_check
          %p209 = pneg %p129
        $region26: #{tpu_custom_call.1} parent=11 // pred_check_branch
          %211 = sbr.rel (%p209) target = $region28
        $region27: #{tpu_custom_call.1} parent=11 // pred_region
          _
        $region28: #{tpu_custom_call.1} parent=11 // pred_fallthru
          _
        // Predicated region
        $region29: #{tpu_custom_call.1} parent=11 // pred_check
          %p212 = pneg %p150
        $region30: #{tpu_custom_call.1} parent=11 // pred_check_branch
          %214 = sbr.rel (%p212) target = $region32
        $region31: #{tpu_custom_call.1} parent=11 // pred_region
          _
        $region32: #{tpu_custom_call.1} parent=11 // pred_fallthru
          _
      $region12: #{tpu_custom_call.1} parent=5 // pred_fallthru
        _
      %p215 = scmp.lt.s32.totalorder %s19, 2
      // Predicated region
      $region33: #{tpu_custom_call.1} parent=5 // pred_check
        %p216 = pneg %p215
      $region34: #{tpu_custom_call.1} parent=5 // pred_check_branch
        %218 = sbr.rel (%p216) target = $region36
      $region35: #{tpu_custom_call.1} parent=5 // pred_region
        // Predicated region
        $region37: #{tpu_custom_call.1} parent=35 // pred_check
          %p219 = pneg %p39
        $region38: #{tpu_custom_call.1} parent=35 // pred_check_branch
          %221 = sbr.rel (%p219) target = $region40
        $region39: #{tpu_custom_call.1} parent=35 // pred_region
          %s222 = sand.u32 %s29, 1
          %s223 = scalar_lea.sflag [#allocation4], %s222
          %s224 = sand.u32 %s29, 1
          %s225 = smul.addr %s224, 12
          %s226 = scalar_lea.vmem [#allocation3], %s225
          %228 = vsyncadd %s223, 0
          %s229 = smul.addr %s19, 3
          %s230 = smul.addr %s229, 4
          %s231 = scalar_lea.hbm %s0, %s230
          %s233 = sshll.u32 %s231, 4
          %s234 = int_to_ptr.hbm [resolvable:$true] %s233
          %s235 = sshll.u32 %s226, 4
          %s236 = int_to_ptr.vmem [resolvable:$true] %s235
          %238 = dma.hbm_to_vmem [thread:$0]  %s234, 192, %s236, %s223
        $region40: #{tpu_custom_call.1} parent=35 // pred_fallthru
          _
      $region36: #{tpu_custom_call.1} parent=5 // pred_fallthru
        _
      %p239 = scmp.le.s32.totalorder 1, %s19
      %p240 = scmp.lt.s32.totalorder %s19, 3
      %p241 = pnand %p239, %p240
      %p242 = pneg %p241
      // Predicated region
      $region41: #{tpu_custom_call.1} parent=5 // pred_check
        _
      $region42: #{tpu_custom_call.1} parent=5 // pred_check_branch
        %244 = sbr.rel (%p241) target = $region44
      $region43: #{tpu_custom_call.1} parent=5 // pred_region
        %s245 = ssub.s32 %s19, 1
        %s246 = sand.u32 %s32, 1
        %s247 = scalar_lea.sflag [#allocation4], %s246
        %s248 = sand.u32 %s32, 1
        %s249 = smul.addr %s248, 12
        %s250 = scalar_lea.vmem [#allocation3], %s249
        // Predicated region
        $region45: #{tpu_custom_call.1} parent=43 // pred_check
          %p251 = pneg %p45
        $region46: #{tpu_custom_call.1} parent=43 // pred_check_branch
          %253 = sbr.rel (%p251) target = $region48
        $region47: #{tpu_custom_call.1} parent=43 // pred_region
          %255 = dma.done %s247, 192
        $region48: #{tpu_custom_call.1} parent=43 // pred_fallthru
          _
        // Predicated region
        $region49: #{tpu_custom_call.1} parent=43 // pred_check
          %p256 = pneg %p66
        $region50: #{tpu_custom_call.1} parent=43 // pred_check_branch
          %258 = sbr.rel (%p256) target = $region52
        $region51: #{tpu_custom_call.1} parent=43 // pred_region
          %260 = dma.done [#allocation7], 256
        $region52: #{tpu_custom_call.1} parent=43 // pred_fallthru
          _
        %s261 = sand.u32 %s32, 1
        %s262 = scalar_lea.sflag [#allocation4], %s261
        %s263 = sand.u32 %s32, 1
        %s264 = smul.addr %s263, 12
        %s265 = scalar_lea.vmem [#allocation3], %s264
        %p266 = pneg %p45
        %p267 = pneg %p42
        %p268 = pneg %p66
        %p269 = pneg %p63
        %p270 = pneg %p87
        %p271 = pneg %p84
        %p272 = pneg %p108
        %p273 = pneg %p105
        %p274 = pneg %p129
        %p275 = pneg %p126
        %p276 = pneg %p150
        %p277 = pneg %p147
        %p278 = pneg %p176
        %p279 = pneg %p173
        %s280 = sand.u32 %s163, 1
        %s281 = scalar_lea.sflag [#allocation5], %s280
        %s282 = sand.u32 %s163, 1
        %s283 = smul.addr %s282, 16
        %s284 = scalar_lea.vmem [#allocation8], %s283
        %v285 = vld [vmem:[#allocation6] sm:$0xff]
        %v286 = vld [vmem:[#allocation6 + $0x8] sm:$0xff]
        %v287 = vmul.f32 %v285, %v285
        %v288 = vmul.f32 %v286, %v286
        %vm289 = vcmask 556032
        %v290 = vsel %vm289, %v288, 0.0
        %v291 = vadd.f32 %v287, %v290
        %292 = vadd.xlane.f32.xlu0 %v291
        %v293 = vpop.xlane.xlu0 %292
        %v294 = vrot.slane %v287, 4
        %v295 = vadd.f32 %v287, %v294
        %v296 = vrot.slane %v295, 2
        %v297 = vadd.f32 %v295, %v296
        %v298 = vrot.slane %v297, 1
        %v299 = vadd.f32 %v297, %v298
        %v300 = vrot.slane %v290, 4
        %v301 = vadd.f32 %v290, %v300
        %v302 = vrot.slane %v301, 2
        %v303 = vadd.f32 %v301, %v302
        %v304 = vrot.slane %v303, 1
        %v305 = vadd.f32 %v303, %v304
        %v306 = vld [vmem:[%s2] sm:$0xff]
        %v307 = vmul.f32 %v306, %v306
        %v308 = vmul.f32 %v307, %v293
        %v309 = vadd.f32 %v308, 0.0
        %vm310 = vcmask 15368
        %v311 = vsel %vm310, %v309, 0.0
        %v312 = vrot.slane %v311, 4
        %v313 = vadd.f32 %v311, %v312
        %v314 = vrot.slane %v313, 2
        %v315 = vadd.f32 %v313, %v314
        %v316 = vrot.slane %v315, 1
        %v317 = vadd.f32 %v315, %v316
        %v318 = vrsqrt.pop %v317
        %v319 = vmul.f32 %v318, %v317
        %v320 = vmul.f32 %v319, %v318
        %v321 = vmul.f32 0.5, %v320
        %v322 = vsub.f32 1.5, %v321
        %v323 = vmul.f32 %v318, %v322
        %v324 = vmul.f32 %v317, %v323
        %vm325 = vcmp.eq.f32.partialorder %v317, inf
        %v326 = vsel %vm325, %v317, %v324
        %vm327 = vcmp.eq.f32.partialorder %v317, 0.0
        %v328 = vand.u32 %v317, 2147483648
        %v329 = vsel %vm327, %v328, %v326
        %v330 = vld [vmem:[%s4] sm:$0x1]
        %vm331 = vcmp.gt.f32.partialorder %v329, %v330
        %v332 = vsel %vm331, 1, 0
        %v333 = vcvt.s32.f32 %v332
        %v334 = vadd.f32 %v306, 0.0
        %v335 = vperm.slane %v333, 0
        %v336 = vmul.f32 %v335, %v334
        %vm337 = vcmask 7168
        %v338 = vsel %vm337, %v309, 0.0
        %v339 = vrot.slane %v338, 4
        %v340 = vadd.f32 %v338, %v339
        %v341 = vrot.slane %v340, 2
        %v342 = vadd.f32 %v340, %v341
        %v343 = vrot.slane %v342, 1
        %v344 = vadd.f32 %v342, %v343
        %v345 = vrsqrt.pop %v344
        %v346 = vmul.f32 %v345, %v344
        %v347 = vmul.f32 %v346, %v345
        %v348 = vmul.f32 0.5, %v347
        %v349 = vsub.f32 1.5, %v348
        %v350 = vmul.f32 %v345, %v349
        %v351 = vmul.f32 %v344, %v350
        %vm352 = vcmp.eq.f32.partialorder %v344, inf
        %v353 = vsel %vm352, %v344, %v351
        %vm354 = vcmp.eq.f32.partialorder %v344, 0.0
        %v355 = vand.u32 %v344, 2147483648
        %v356 = vsel %vm354, %v355, %v353
        %vm357 = vcmp.gt.f32.partialorder %v356, %v330
        %v358 = vsel %vm357, 1, 0
        %v359 = vcvt.s32.f32 %v358
        %361 = vrot.lane.b32.xlu0 %v336, 127
        %v362 = vpop.permute.xlu0 %361
        %v364 = vadd.f32 %v306, %v362
        %v365 = vperm.slane %v359, 0
        %v366 = vmul.f32 %v365, %v364
        %s367 = scalar_lea.vmem %s3, 2
        %v368 = vld [vmem:[%s367] ss:$4 sm:$0x3]
        %v369 = vmul.f32 %v368, %v368
        %v372 = vrot.slane %v305, 7
        %vm373 = vcmask 1040384
        %v374 = vsel %vm373, %v299, %v372
        %v376 = vmul.f32 %v369, %v374
        %v378 = vperm.slane %v376, 0
        %v379 = vperm.slane %v376, 1
        %v382 = vsel %vm373, %v378, 0.0
        %vm383 = vcmask 548864
        %v384 = vsel %vm383, %v379, 0.0
        %v385 = vadd.f32 %v382, %v384
        %386 = vadd.xlane.f32.xlu0 %v385
        %v387 = vpop.xlane.xlu0 %386
        %v388 = vadd.f32 %v387, 0.0
        %v389 = vrsqrt.pop %v388
        %v390 = vmul.f32 %v389, %v388
        %v391 = vmul.f32 %v390, %v389
        %v392 = vmul.f32 0.5, %v391
        %v393 = vsub.f32 1.5, %v392
        %v394 = vmul.f32 %v389, %v393
        %v395 = vmul.f32 %v388, %v394
        %vm396 = vcmp.eq.f32.partialorder %v388, inf
        %v397 = vsel %vm396, %v388, %v395
        %vm398 = vcmp.eq.f32.partialorder %v388, 0.0
        %v399 = vand.u32 %v388, 2147483648
        %v400 = vsel %vm398, %v399, %v397
        %v401 = vld [vmem:[%s5] sm:$0x1]
        %v403 = vperm.slane %v401, 0
        %404 = vrot.lane.b32.xlu0 %v403, 126
        %v405 = vpop.permute.xlu0 %404
        %vm407 = vcmp.gt.f32.partialorder %v400, %v405
        %v408 = vsel %vm407, 1, 0
        %v409 = vcvt.s32.f32 %v408
        %v410 = vadd.f32 %v368, 0.0
        %412 = vset.pattern.permute.xlu0 0
        %413 = vperm.xlu0 %412, %v409
        %v414 = vpop.permute.xlu0 %413
        %v417 = vperm.slane %v410, 0
        %v418 = vperm.slane %v410, 1
        %v421 = vmul.f32 %v414, %v417
        %v422 = vmul.f32 %v414, %v418
        %s423 = scalar_lea.vmem %s3, 1
        %v424 = vld [vmem:[%s423] ss:$4 sm:$0x3]
        %v425 = vmul.f32 %v424, %v424
        %v426 = vmul.f32 %v425, %v374
        %v428 = vperm.slane %v426, 0
        %v429 = vperm.slane %v426, 1
        %v432 = vsel %vm373, %v428, 0.0
        %v433 = vsel %vm383, %v429, 0.0
        %v434 = vadd.f32 %v432, %v433
        %435 = vadd.xlane.f32.xlu0 %v434
        %v436 = vpop.xlane.xlu0 %435
        %v437 = vadd.f32 %v436, 0.0
        %v438 = vrsqrt.pop %v437
        %v439 = vmul.f32 %v438, %v437
        %v440 = vmul.f32 %v439, %v438
        %v441 = vmul.f32 0.5, %v440
        %v442 = vsub.f32 1.5, %v441
        %v443 = vmul.f32 %v438, %v442
        %v444 = vmul.f32 %v437, %v443
        %vm445 = vcmp.eq.f32.partialorder %v437, inf
        %v446 = vsel %vm445, %v437, %v444
        %vm447 = vcmp.eq.f32.partialorder %v437, 0.0
        %v448 = vand.u32 %v437, 2147483648
        %v449 = vsel %vm447, %v448, %v446
        %450 = vrot.lane.b32.xlu0 %v403, 127
        %v451 = vpop.permute.xlu0 %450
        %vm453 = vcmp.gt.f32.partialorder %v449, %v451
        %v454 = vsel %vm453, 1, 0
        %v455 = vcvt.s32.f32 %v454
        %v458 = vrot.slane %v422, 7
        %v459 = vsel %vm373, %v421, %v458
        %v461 = vadd.f32 %v424, %v459
        %463 = vset.pattern.permute.xlu0 0
        %464 = vperm.xlu0 %463, %v455
        %v465 = vpop.permute.xlu0 %464
        %v468 = vperm.slane %v461, 0
        %v469 = vperm.slane %v461, 1
        %v472 = vmul.f32 %v465, %v468
        %v473 = vmul.f32 %v465, %v469
        %v474 = vld [vmem:[%s3] ss:$4 sm:$0x3]
        %v475 = vmul.f32 %v474, %v474
        %v476 = vmul.f32 %v475, %v374
        %v478 = vperm.slane %v476, 0
        %v479 = vperm.slane %v476, 1
        %v482 = vsel %vm373, %v478, 0.0
        %v483 = vsel %vm383, %v479, 0.0
        %v484 = vadd.f32 %v482, %v483
        %485 = vadd.xlane.f32.xlu0 %v484
        %v486 = vpop.xlane.xlu0 %485
        %v487 = vadd.f32 %v486, 0.0
        %v488 = vrsqrt.pop %v487
        %v489 = vmul.f32 %v488, %v487
        %v490 = vmul.f32 %v489, %v488
        %v491 = vmul.f32 0.5, %v490
        %v492 = vsub.f32 1.5, %v491
        %v493 = vmul.f32 %v488, %v492
        %v494 = vmul.f32 %v487, %v493
        %vm495 = vcmp.eq.f32.partialorder %v487, inf
        %v496 = vsel %vm495, %v487, %v494
        %vm497 = vcmp.eq.f32.partialorder %v487, 0.0
        %v498 = vand.u32 %v487, 2147483648
        %v499 = vsel %vm497, %v498, %v496
        %vm500 = vcmp.gt.f32.partialorder %v499, %v401
        %v501 = vsel %vm500, 1, 0
        %v502 = vcvt.s32.f32 %v501
        %v505 = vrot.slane %v473, 7
        %v506 = vsel %vm373, %v472, %v505
        %v508 = vadd.f32 %v474, %v506
        %510 = vset.pattern.permute.xlu0 0
        %511 = vperm.xlu0 %510, %v502
        %v512 = vpop.permute.xlu0 %511
        %v515 = vperm.slane %v508, 0
        %v516 = vperm.slane %v508, 1
        %v519 = vmul.f32 %v512, %v515
        %v520 = vmul.f32 %v512, %v516
        %522 = vset.pattern.permute.xlu0 0
        %523 = vperm.xlu0 %522, %v366
        %v524 = vpop.permute.xlu0 %523
        %v526 = vmul.f32 %v285, %v524
        %v527 = vmul.f32 %v286, %v524
        %v528 = vperm.slane %v519, 0
        %v529 = vperm.slane %v520, 0
        %v530 = vmul.f32 %v526, %v528
        %v531 = vmul.f32 %v527, %v529
        %v532 = vld [vmem:[%s250] sm:$0xff]
        %v533 = vld [vmem:[%s250 + $0x8] sm:$0xf]
        %v534 = vlaneseq
        %v535 = vand.u32 %v534, 127
        %v536 = vadd.s32 %v535, 128
        %vm537 = vcmp.lt.s32.totalorder %v535, 0
        %v538 = vsub.s32 0, %v535
        %v539 = vsel %vm537, %v538, %v535
        %v540 = vshrl.u32 %v539, 4
        %v541 = vand.u32 %v539, 15
        %v542 = vsub.s32 0, %v541
        %v543 = vsel %vm537, %v542, %v541
        %vm544 = vcmp.lt.s32.totalorder %v536, 0
        %v545 = vsub.s32 0, %v536
        %v546 = vsel %vm544, %v545, %v536
        %v547 = vshrl.u32 %v546, 4
        %v548 = vand.u32 %v546, 15
        %v549 = vsub.s32 0, %v548
        %v550 = vsel %vm544, %v549, %v548
        %vm551 = vcmp.ne.s32.totalorder %v543, 0
        %vm552 = vcmp.ne.s32.totalorder %v550, 0
        %vm553 = vcmp.lt.s32.totalorder %v543, 0
        %vm554 = vcmp.lt.s32.totalorder %v550, 0
        %vm555 = vmand %vm553, %vm551
        %vm556 = vmand %vm554, %vm552
        %v557 = vadd.s32 %v543, 16
        %v558 = vadd.s32 %v550, 16
        %v559 = vsel %vm555, %v557, %v543
        %v560 = vsel %vm556, %v558, %v550
        %v561 = vadd.s32 %v559, 4294967293
        %v562 = vadd.s32 %v560, 4294967293
        %vm563 = vcmp.ge.s32.totalorder %v561, 0
        %vm564 = vcmp.ge.s32.totalorder %v562, 0
        %vm565 = vcmp.lt.s32.totalorder %v561, 16
        %vm566 = vcmp.lt.s32.totalorder %v562, 16
        %vm567 = vmand %vm563, %vm565
        %vm568 = vmand %vm564, %vm566
        %v569 = vadd.s32 %v559, 4294967294
        %v570 = vadd.s32 %v560, 4294967294
        %vm571 = vcmp.ge.s32.totalorder %v569, 0
        %vm572 = vcmp.ge.s32.totalorder %v570, 0
        %vm573 = vcmp.lt.s32.totalorder %v569, 16
        %vm574 = vcmp.lt.s32.totalorder %v570, 16
        %vm575 = vmand %vm571, %vm573
        %vm576 = vmand %vm572, %vm574
        %v577 = vadd.s32 %v559, 4294967295
        %v578 = vadd.s32 %v560, 4294967295
        %vm579 = vcmp.ge.s32.totalorder %v577, 0
        %vm580 = vcmp.ge.s32.totalorder %v578, 0
        %vm581 = vcmp.lt.s32.totalorder %v577, 16
        %vm582 = vcmp.lt.s32.totalorder %v578, 16
        %vm583 = vmand %vm579, %vm581
        %vm584 = vmand %vm580, %vm582
        %v585 = vadd.s32 %v559, 1
        %v586 = vadd.s32 %v560, 1
        %vm587 = vcmp.ge.s32.totalorder %v585, 0
        %vm588 = vcmp.ge.s32.totalorder %v586, 0
        %vm589 = vcmp.lt.s32.totalorder %v585, 16
        %vm590 = vcmp.lt.s32.totalorder %v586, 16
        %vm591 = vmand %vm587, %vm589
        %vm592 = vmand %vm588, %vm590
        %v593 = vadd.s32 %v559, 2
        %v594 = vadd.s32 %v560, 2
        %vm595 = vcmp.ge.s32.totalorder %v593, 0
        %vm596 = vcmp.ge.s32.totalorder %v594, 0
        %vm597 = vcmp.lt.s32.totalorder %v593, 16
        %vm598 = vcmp.lt.s32.totalorder %v594, 16
        %vm599 = vmand %vm595, %vm597
        %vm600 = vmand %vm596, %vm598
        %v601 = vadd.s32 %v559, 3
        %v602 = vadd.s32 %v560, 3
        %vm603 = vcmp.ge.s32.totalorder %v601, 0
        %vm604 = vcmp.ge.s32.totalorder %v602, 0
        %vm605 = vcmp.lt.s32.totalorder %v601, 16
        %vm606 = vcmp.lt.s32.totalorder %v602, 16
        %vm607 = vmand %vm603, %vm605
        %vm608 = vmand %vm604, %vm606
        %v609 = vsel %vm567, 1, 0
        %v610 = vsel %vm568, 1, 0
        %vm611 = vcmp.eq.s32.totalorder %v609, 1
        %vm612 = vcmp.eq.s32.totalorder %v610, 1
        %615 = vst [vmem:[#allocation1] ss:$2 sm:$0xff] %v532
        %s616 = scalar_lea.vmem [#allocation1], 16
        %617 = vst [vmem:[%s616] ss:$2 sm:$0xff] %v533
        %v618 = vld.sshfl [vmem:[#allocation1] sm:$0xff pattern:$0x75316420]
        %v619 = vld.sshfl [vmem:[#allocation1 + $0x8] sm:$0xff pattern:$0x75316420]
        %v620 = vld.sshfl [vmem:[#allocation1 + $0x10] sm:$0xff pattern:$0x75316420]
        %621 = vrot.lane.b32.xlu0 %v618, 115
        %v622 = vpop.permute.xlu0 %621
        %623 = vrot.lane.b32.xlu0 %v619, 115
        %v624 = vpop.permute.xlu0 %623
        %625 = vrot.lane.b32.xlu0 %v620, 115
        %v626 = vpop.permute.xlu0 %625
        %vm627 = vcmask 941056
        %v628 = vsel %vm627, %v622, %v624
        %v629 = vsel %vm627, %v624, %v626
        %v632 = vsel %vm611, %v628, 0.0
        %v633 = vsel %vm612, %v629, 0.0
        %634 = vst [vmem:[#allocation2] sm:$0xf] %v632
        %635 = vst [vmem:[#allocation2 + $0x8] sm:$0xf] %v633
        %v636 = vsel %vm575, 1, 0
        %v637 = vsel %vm576, 1, 0
        %vm638 = vcmp.eq.s32.totalorder %v636, 1
        %vm639 = vcmp.eq.s32.totalorder %v637, 1
        %640 = vst [vmem:[#allocation1] ss:$2 sm:$0xff] %v532
        %s641 = scalar_lea.vmem [#allocation1], 16
        %642 = vst [vmem:[%s641] ss:$2 sm:$0xff] %v533
        %v643 = vld.sshfl [vmem:[#allocation1] sm:$0xff pattern:$0x75316420]
        %v644 = vld.sshfl [vmem:[#allocation1 + $0x8] sm:$0xff pattern:$0x75316420]
        %v645 = vld.sshfl [vmem:[#allocation1 + $0x10] sm:$0xff pattern:$0x75316420]
        %646 = vrot.lane.b32.xlu0 %v643, 114
        %v647 = vpop.permute.xlu0 %646
        %648 = vrot.lane.b32.xlu0 %v644, 114
        %v649 = vpop.permute.xlu0 %648
        %650 = vrot.lane.b32.xlu0 %v645, 114
        %v651 = vpop.permute.xlu0 %650
        %vm652 = vcmask 932864
        %v653 = vsel %vm652, %v647, %v649
        %v654 = vsel %vm652, %v649, %v651
        %v657 = vsel %vm638, %v653, 0.0
        %v658 = vsel %vm639, %v654, 0.0
        %v661 = vrot.slane %v657, 4
        %v662 = vrot.slane %v658, 4
        %665 = vst [vmem:[#allocation2] sm:$0xf0] %v661
        %666 = vst [vmem:[#allocation2 + $0x8] sm:$0xf0] %v662
        %v667 = vsel %vm583, 1, 0
        %v668 = vsel %vm584, 1, 0
        %vm669 = vcmp.eq.s32.totalorder %v667, 1
        %vm670 = vcmp.eq.s32.totalorder %v668, 1
        %671 = vst [vmem:[#allocation1] ss:$2 sm:$0xff] %v532
        %s672 = scalar_lea.vmem [#allocation1], 16
        %673 = vst [vmem:[%s672] ss:$2 sm:$0xff] %v533
        %v674 = vld.sshfl [vmem:[#allocation1] sm:$0xff pattern:$0x75316420]
        %v675 = vld.sshfl [vmem:[#allocation1 + $0x8] sm:$0xff pattern:$0x75316420]
        %v676 = vld.sshfl [vmem:[#allocation1 + $0x10] sm:$0xff pattern:$0x75316420]
        %677 = vrot.lane.b32.xlu0 %v674, 113
        %v678 = vpop.permute.xlu0 %677
        %679 = vrot.lane.b32.xlu0 %v675, 113
        %v680 = vpop.permute.xlu0 %679
        %681 = vrot.lane.b32.xlu0 %v676, 113
        %v682 = vpop.permute.xlu0 %681
        %vm683 = vcmask 924672
        %v684 = vsel %vm683, %v678, %v680
        %v685 = vsel %vm683, %v680, %v682
        %v688 = vsel %vm669, %v684, 0.0
        %v689 = vsel %vm670, %v685, 0.0
        %690 = vst [vmem:[#allocation2 + $0x10] sm:$0xf] %v688
        %691 = vst [vmem:[#allocation2 + $0x18] sm:$0xf] %v689
        %s692 = scalar_lea.vmem [#allocation1], 1
        %693 = vst [vmem:[%s692] ss:$2 sm:$0xff] %v532
        %s694 = scalar_lea.vmem [#allocation1], 17
        %695 = vst [vmem:[%s694] ss:$2 sm:$0xff] %v533
        %v696 = vld.sshfl [vmem:[#allocation1] sm:$0xff pattern:$0x75316420]
        %v697 = vld.sshfl [vmem:[#allocation1 + $0x8] sm:$0xff pattern:$0x75316420]
        %v698 = vld.sshfl [vmem:[#allocation1 + $0x10] sm:$0xff pattern:$0x75316420]
        %699 = vrot.lane.b32.xlu0 %v696, 112
        %v700 = vpop.permute.xlu0 %699
        %701 = vrot.lane.b32.xlu0 %v697, 112
        %v702 = vpop.permute.xlu0 %701
        %703 = vrot.lane.b32.xlu0 %v698, 112
        %v704 = vpop.permute.xlu0 %703
        %vm705 = vcmask 916480
        %v706 = vsel %vm705, %v700, %v702
        %v707 = vsel %vm705, %v702, %v704
        %710 = vst [vmem:[#allocation2 + $0x10] sm:$0xf0] %v706
        %711 = vst [vmem:[#allocation2 + $0x18] sm:$0xf0] %v707
        %v712 = vsel %vm591, 1, 0
        %v713 = vsel %vm592, 1, 0
        %vm714 = vcmp.eq.s32.totalorder %v712, 1
        %vm715 = vcmp.eq.s32.totalorder %v713, 1
        %716 = vst [vmem:[#allocation1] ss:$2 sm:$0xff] %v532
        %s717 = scalar_lea.vmem [#allocation1], 16
        %718 = vst [vmem:[%s717] ss:$2 sm:$0xff] %v533
        %v719 = vld.sshfl [vmem:[#allocation1] sm:$0xff pattern:$0x75316420]
        %v720 = vld.sshfl [vmem:[#allocation1 + $0x8] sm:$0xff pattern:$0x75316420]
        %v721 = vld.sshfl [vmem:[#allocation1 + $0x10] sm:$0xff pattern:$0x75316420]
        %722 = vrot.lane.b32.xlu0 %v719, 111
        %v723 = vpop.permute.xlu0 %722
        %724 = vrot.lane.b32.xlu0 %v720, 111
        %v725 = vpop.permute.xlu0 %724
        %726 = vrot.lane.b32.xlu0 %v721, 111
        %v727 = vpop.permute.xlu0 %726
        %vm728 = vcmask 908288
        %v729 = vsel %vm728, %v723, %v725
        %v730 = vsel %vm728, %v725, %v727
        %v733 = vsel %vm714, %v729, 0.0
        %v734 = vsel %vm715, %v730, 0.0
        %735 = vst [vmem:[#allocation2 + $0x20] sm:$0xf] %v733
        %736 = vst [vmem:[#allocation2 + $0x28] sm:$0xf] %v734
        %v737 = vsel %vm599, 1, 0
        %v738 = vsel %vm600, 1, 0
        %vm739 = vcmp.eq.s32.totalorder %v737, 1
        %vm740 = vcmp.eq.s32.totalorder %v738, 1
        %741 = vst [vmem:[#allocation1] ss:$2 sm:$0xff] %v532
        %s742 = scalar_lea.vmem [#allocation1], 16
        %743 = vst [vmem:[%s742] ss:$2 sm:$0xff] %v533
        %v744 = vld.sshfl [vmem:[#allocation1] sm:$0xff pattern:$0x75316420]
        %v745 = vld.sshfl [vmem:[#allocation1 + $0x8] sm:$0xff pattern:$0x75316420]
        %v746 = vld.sshfl [vmem:[#allocation1 + $0x10] sm:$0xff pattern:$0x75316420]
        %747 = vrot.lane.b32.xlu0 %v744, 110
        %v748 = vpop.permute.xlu0 %747
        %749 = vrot.lane.b32.xlu0 %v745, 110
        %v750 = vpop.permute.xlu0 %749
        %751 = vrot.lane.b32.xlu0 %v746, 110
        %v752 = vpop.permute.xlu0 %751
        %vm753 = vcmask 900096
        %v754 = vsel %vm753, %v748, %v750
        %v755 = vsel %vm753, %v750, %v752
        %v758 = vsel %vm739, %v754, 0.0
        %v759 = vsel %vm740, %v755, 0.0
        %v762 = vrot.slane %v758, 4
        %v763 = vrot.slane %v759, 4
        %766 = vst [vmem:[#allocation2 + $0x20] sm:$0xf0] %v762
        %767 = vst [vmem:[#allocation2 + $0x28] sm:$0xf0] %v763
        %v768 = vsel %vm607, 1, 0
        %v769 = vsel %vm608, 1, 0
        %vm770 = vcmp.eq.s32.totalorder %v768, 1
        %vm771 = vcmp.eq.s32.totalorder %v769, 1
        %772 = vst [vmem:[#allocation1] ss:$2 sm:$0xff] %v532
        %s773 = scalar_lea.vmem [#allocation1], 16
        %774 = vst [vmem:[%s773] ss:$2 sm:$0xff] %v533
        %v775 = vld.sshfl [vmem:[#allocation1] sm:$0xff pattern:$0x75316420]
        %v776 = vld.sshfl [vmem:[#allocation1 + $0x8] sm:$0xff pattern:$0x75316420]
        %v777 = vld.sshfl [vmem:[#allocation1 + $0x10] sm:$0xff pattern:$0x75316420]
        %778 = vrot.lane.b32.xlu0 %v775, 109
        %v779 = vpop.permute.xlu0 %778
        %780 = vrot.lane.b32.xlu0 %v776, 109
        %v781 = vpop.permute.xlu0 %780
        %782 = vrot.lane.b32.xlu0 %v777, 109
        %v783 = vpop.permute.xlu0 %782
        %vm784 = vcmask 891904
        %v785 = vsel %vm784, %v779, %v781
        %v786 = vsel %vm784, %v781, %v783
        %v789 = vsel %vm770, %v785, 0.0
        %v790 = vsel %vm771, %v786, 0.0
        %791 = vst [vmem:[#allocation2 + $0x30] sm:$0xf] %v789
        %792 = vst [vmem:[#allocation2 + $0x38] sm:$0xf] %v790
        %793 = vst [vmem:[#allocation1] ss:$2 sm:$0xff] %v532
        %s794 = scalar_lea.vmem [#allocation1], 16
        %795 = vst [vmem:[%s794] ss:$2 sm:$0xff] %v533
        %v796 = vld.sshfl [vmem:[#allocation1] sm:$0xff pattern:$0x75316420]
        %v797 = vld.sshfl [vmem:[#allocation1 + $0x8] sm:$0xff pattern:$0x75316420]
        %v798 = vld.sshfl [vmem:[#allocation1 + $0x10] sm:$0xff pattern:$0x75316420]
        %799 = vrot.lane.b32.xlu0 %v796, 99
        %v800 = vpop.permute.xlu0 %799
        %801 = vrot.lane.b32.xlu0 %v797, 99
        %v802 = vpop.permute.xlu0 %801
        %803 = vrot.lane.b32.xlu0 %v798, 99
        %v804 = vpop.permute.xlu0 %803
        %vm805 = vcmask 809984
        %v806 = vsel %vm805, %v800, %v802
        %v807 = vsel %vm805, %v802, %v804
        %v810 = vsel %vm611, %v806, 0.0
        %v811 = vsel %vm612, %v807, 0.0
        %v814 = vrot.slane %v810, 4
        %v815 = vrot.slane %v811, 4
        %818 = vst [vmem:[#allocation2 + $0x30] sm:$0xf0] %v814
        %819 = vst [vmem:[#allocation2 + $0x38] sm:$0xf0] %v815
        %820 = vst [vmem:[#allocation1] ss:$2 sm:$0xff] %v532
        %s821 = scalar_lea.vmem [#allocation1], 16
        %822 = vst [vmem:[%s821] ss:$2 sm:$0xff] %v533
        %v823 = vld.sshfl [vmem:[#allocation1] sm:$0xff pattern:$0x75316420]
        %v824 = vld.sshfl [vmem:[#allocation1 + $0x8] sm:$0xff pattern:$0x75316420]
        %v825 = vld.sshfl [vmem:[#allocation1 + $0x10] sm:$0xff pattern:$0x75316420]
        %826 = vrot.lane.b32.xlu0 %v823, 98
        %v827 = vpop.permute.xlu0 %826
        %828 = vrot.lane.b32.xlu0 %v824, 98
        %v829 = vpop.permute.xlu0 %828
        %830 = vrot.lane.b32.xlu0 %v825, 98
        %v831 = vpop.permute.xlu0 %830
        %vm832 = vcmask 801792
        %v833 = vsel %vm832, %v827, %v829
        %v834 = vsel %vm832, %v829, %v831
        %v837 = vsel %vm638, %v833, 0.0
        %v838 = vsel %vm639, %v834, 0.0
        %839 = vst [vmem:[#allocation2 + $0x40] sm:$0xf] %v837
        %840 = vst [vmem:[#allocation2 + $0x48] sm:$0xf] %v838
        %841 = vst [vmem:[#allocation1] ss:$2 sm:$0xff] %v532
        %s842 = scalar_lea.vmem [#allocation1], 16
        %843 = vst [vmem:[%s842] ss:$2 sm:$0xff] %v533
        %v844 = vld.sshfl [vmem:[#allocation1] sm:$0xff pattern:$0x75316420]
        %v845 = vld.sshfl [vmem:[#allocation1 + $0x8] sm:$0xff pattern:$0x75316420]
        %v846 = vld.sshfl [vmem:[#allocation1 + $0x10] sm:$0xff pattern:$0x75316420]
        %847 = vrot.lane.b32.xlu0 %v844, 97
        %v848 = vpop.permute.xlu0 %847
        %849 = vrot.lane.b32.xlu0 %v845, 97
        %v850 = vpop.permute.xlu0 %849
        %851 = vrot.lane.b32.xlu0 %v846, 97
        %v852 = vpop.permute.xlu0 %851
        %vm853 = vcmask 793600
        %v854 = vsel %vm853, %v848, %v850
        %v855 = vsel %vm853, %v850, %v852
        %v858 = vsel %vm669, %v854, 0.0
        %v859 = vsel %vm670, %v855, 0.0
        %v862 = vrot.slane %v858, 4
        %v863 = vrot.slane %v859, 4
        %866 = vst [vmem:[#allocation2 + $0x40] sm:$0xf0] %v862
        %867 = vst [vmem:[#allocation2 + $0x48] sm:$0xf0] %v863
        %868 = vst [vmem:[#allocation1] ss:$2 sm:$0xff] %v532
        %s869 = scalar_lea.vmem [#allocation1], 16
        %870 = vst [vmem:[%s869] ss:$2 sm:$0xff] %v533
        %v871 = vld.sshfl [vmem:[#allocation1] sm:$0xff pattern:$0x75316420]
        %v872 = vld.sshfl [vmem:[#allocation1 + $0x8] sm:$0xff pattern:$0x75316420]
        %v873 = vld.sshfl [vmem:[#allocation1 + $0x10] sm:$0xff pattern:$0x75316420]
        %874 = vrot.lane.b32.xlu0 %v871, 96
        %v875 = vpop.permute.xlu0 %874
        %876 = vrot.lane.b32.xlu0 %v872, 96
        %v877 = vpop.permute.xlu0 %876
        %878 = vrot.lane.b32.xlu0 %v873, 96
        %v879 = vpop.permute.xlu0 %878
        %vm880 = vcmask 785408
        %v881 = vsel %vm880, %v875, %v877
        %v882 = vsel %vm880, %v877, %v879
        %885 = vst [vmem:[#allocation2 + $0x50] sm:$0xf] %v881
        %886 = vst [vmem:[#allocation2 + $0x58] sm:$0xf] %v882
        %887 = vst [vmem:[#allocation1] ss:$2 sm:$0xff] %v532
        %s888 = scalar_lea.vmem [#allocation1], 16
        %889 = vst [vmem:[%s888] ss:$2 sm:$0xff] %v533
        %v890 = vld.sshfl [vmem:[#allocation1] sm:$0xff pattern:$0x75316420]
        %v891 = vld.sshfl [vmem:[#allocation1 + $0x8] sm:$0xff pattern:$0x75316420]
        %v892 = vld.sshfl [vmem:[#allocation1 + $0x10] sm:$0xff pattern:$0x75316420]
        %893 = vrot.lane.b32.xlu0 %v890, 95
        %v894 = vpop.permute.xlu0 %893
        %895 = vrot.lane.b32.xlu0 %v891, 95
        %v896 = vpop.permute.xlu0 %895
        %897 = vrot.lane.b32.xlu0 %v892, 95
        %v898 = vpop.permute.xlu0 %897
        %vm899 = vcmask 777216
        %v900 = vsel %vm899, %v894, %v896
        %v901 = vsel %vm899, %v896, %v898
        %v904 = vsel %vm714, %v900, 0.0
        %v905 = vsel %vm715, %v901, 0.0
        %v908 = vrot.slane %v904, 4
        %v909 = vrot.slane %v905, 4
        %912 = vst [vmem:[#allocation2 + $0x50] sm:$0xf0] %v908
        %913 = vst [vmem:[#allocation2 + $0x58] sm:$0xf0] %v909
        %914 = vst [vmem:[#allocation1] ss:$2 sm:$0xff] %v532
        %s915 = scalar_lea.vmem [#allocation1], 16
        %916 = vst [vmem:[%s915] ss:$2 sm:$0xff] %v533
        %v917 = vld.sshfl [vmem:[#allocation1] sm:$0xff pattern:$0x75316420]
        %v918 = vld.sshfl [vmem:[#allocation1 + $0x8] sm:$0xff pattern:$0x75316420]
        %v919 = vld.sshfl [vmem:[#allocation1 + $0x10] sm:$0xff pattern:$0x75316420]
        %920 = vrot.lane.b32.xlu0 %v917, 94
        %v921 = vpop.permute.xlu0 %920
        %922 = vrot.lane.b32.xlu0 %v918, 94
        %v923 = vpop.permute.xlu0 %922
        %924 = vrot.lane.b32.xlu0 %v919, 94
        %v925 = vpop.permute.xlu0 %924
        %vm926 = vcmask 769024
        %v927 = vsel %vm926, %v921, %v923
        %v928 = vsel %vm926, %v923, %v925
        %v931 = vsel %vm739, %v927, 0.0
        %v932 = vsel %vm740, %v928, 0.0
        %933 = vst [vmem:[#allocation2 + $0x60] sm:$0xf] %v931
        %934 = vst [vmem:[#allocation2 + $0x68] sm:$0xf] %v932
        %935 = vst [vmem:[#allocation1] ss:$2 sm:$0xff] %v532
        %s936 = scalar_lea.vmem [#allocation1], 16
        %937 = vst [vmem:[%s936] ss:$2 sm:$0xff] %v533
        %v938 = vld.sshfl [vmem:[#allocation1] sm:$0xff pattern:$0x75316420]
        %v939 = vld.sshfl [vmem:[#allocation1 + $0x8] sm:$0xff pattern:$0x75316420]
        %v940 = vld.sshfl [vmem:[#allocation1 + $0x10] sm:$0xff pattern:$0x75316420]
        %941 = vrot.lane.b32.xlu0 %v938, 93
        %v942 = vpop.permute.xlu0 %941
        %943 = vrot.lane.b32.xlu0 %v939, 93
        %v944 = vpop.permute.xlu0 %943
        %945 = vrot.lane.b32.xlu0 %v940, 93
        %v946 = vpop.permute.xlu0 %945
        %vm947 = vcmask 760832
        %v948 = vsel %vm947, %v942, %v944
        %v949 = vsel %vm947, %v944, %v946
        %v952 = vsel %vm770, %v948, 0.0
        %v953 = vsel %vm771, %v949, 0.0
        %v956 = vrot.slane %v952, 4
        %v957 = vrot.slane %v953, 4
        %960 = vst [vmem:[#allocation2 + $0x60] sm:$0xf0] %v956
        %961 = vst [vmem:[#allocation2 + $0x68] sm:$0xf0] %v957
        %962 = vst [vmem:[#allocation1] ss:$2 sm:$0xff] %v532
        %s963 = scalar_lea.vmem [#allocation1], 16
        %964 = vst [vmem:[%s963] ss:$2 sm:$0xff] %v533
        %v965 = vld.sshfl [vmem:[#allocation1] sm:$0xff pattern:$0x75316420]
        %v966 = vld.sshfl [vmem:[#allocation1 + $0x8] sm:$0xff pattern:$0x75316420]
        %v967 = vld.sshfl [vmem:[#allocation1 + $0x10] sm:$0xff pattern:$0x75316420]
        %968 = vrot.lane.b32.xlu0 %v965, 83
        %v969 = vpop.permute.xlu0 %968
        %970 = vrot.lane.b32.xlu0 %v966, 83
        %v971 = vpop.permute.xlu0 %970
        %972 = vrot.lane.b32.xlu0 %v967, 83
        %v973 = vpop.permute.xlu0 %972
        %vm974 = vcmask 678912
        %v975 = vsel %vm974, %v969, %v971
        %v976 = vsel %vm974, %v971, %v973
        %v979 = vsel %vm611, %v975, 0.0
        %v980 = vsel %vm612, %v976, 0.0
        %981 = vst [vmem:[#allocation2 + $0x70] sm:$0xf] %v979
        %982 = vst [vmem:[#allocation2 + $0x78] sm:$0xf] %v980
        %983 = vst [vmem:[#allocation1] ss:$2 sm:$0xff] %v532
        %s984 = scalar_lea.vmem [#allocation1], 16
        %985 = vst [vmem:[%s984] ss:$2 sm:$0xff] %v533
        %v986 = vld.sshfl [vmem:[#allocation1] sm:$0xff pattern:$0x75316420]
        %v987 = vld.sshfl [vmem:[#allocation1 + $0x8] sm:$0xff pattern:$0x75316420]
        %v988 = vld.sshfl [vmem:[#allocation1 + $0x10] sm:$0xff pattern:$0x75316420]
        %989 = vrot.lane.b32.xlu0 %v986, 82
        %v990 = vpop.permute.xlu0 %989
        %991 = vrot.lane.b32.xlu0 %v987, 82
        %v992 = vpop.permute.xlu0 %991
        %993 = vrot.lane.b32.xlu0 %v988, 82
        %v994 = vpop.permute.xlu0 %993
        %vm995 = vcmask 670720
        %v996 = vsel %vm995, %v990, %v992
        %v997 = vsel %vm995, %v992, %v994
        %v1000 = vsel %vm638, %v996, 0.0
        %v1001 = vsel %vm639, %v997, 0.0
        %v1004 = vrot.slane %v1000, 4
        %v1005 = vrot.slane %v1001, 4
        %1008 = vst [vmem:[#allocation2 + $0x70] sm:$0xf0] %v1004
        %1009 = vst [vmem:[#allocation2 + $0x78] sm:$0xf0] %v1005
        %1010 = vst [vmem:[#allocation1] ss:$2 sm:$0xff] %v532
        %s1011 = scalar_lea.vmem [#allocation1], 16
        %1012 = vst [vmem:[%s1011] ss:$2 sm:$0xff] %v533
        %v1013 = vld.sshfl [vmem:[#allocation1] sm:$0xff pattern:$0x75316420]
        %v1014 = vld.sshfl [vmem:[#allocation1 + $0x8] sm:$0xff pattern:$0x75316420]
        %v1015 = vld.sshfl [vmem:[#allocation1 + $0x10] sm:$0xff pattern:$0x75316420]
        %1016 = vrot.lane.b32.xlu0 %v1013, 81
        %v1017 = vpop.permute.xlu0 %1016
        %1018 = vrot.lane.b32.xlu0 %v1014, 81
        %v1019 = vpop.permute.xlu0 %1018
        %1020 = vrot.lane.b32.xlu0 %v1015, 81
        %v1021 = vpop.permute.xlu0 %1020
        %vm1022 = vcmask 662528
        %v1023 = vsel %vm1022, %v1017, %v1019
        %v1024 = vsel %vm1022, %v1019, %v1021
        %v1027 = vsel %vm669, %v1023, 0.0
        %v1028 = vsel %vm670, %v1024, 0.0
        %1029 = vst [vmem:[#allocation2 + $0x80] sm:$0xf] %v1027
        %1030 = vst [vmem:[#allocation2 + $0x88] sm:$0xf] %v1028
        %s1031 = scalar_lea.vmem [#allocation1], 1
        %1032 = vst [vmem:[%s1031] ss:$2 sm:$0xff] %v532
        %s1033 = scalar_lea.vmem [#allocation1], 17
        %1034 = vst [vmem:[%s1033] ss:$2 sm:$0xff] %v533
        %v1035 = vld.sshfl [vmem:[#allocation1] sm:$0xff pattern:$0x75316420]
        %v1036 = vld.sshfl [vmem:[#allocation1 + $0x8] sm:$0xff pattern:$0x75316420]
        %v1037 = vld.sshfl [vmem:[#allocation1 + $0x10] sm:$0xff pattern:$0x75316420]
        %1038 = vrot.lane.b32.xlu0 %v1035, 80
        %v1039 = vpop.permute.xlu0 %1038
        %1040 = vrot.lane.b32.xlu0 %v1036, 80
        %v1041 = vpop.permute.xlu0 %1040
        %1042 = vrot.lane.b32.xlu0 %v1037, 80
        %v1043 = vpop.permute.xlu0 %1042
        %vm1044 = vcmask 654336
        %v1045 = vsel %vm1044, %v1039, %v1041
        %v1046 = vsel %vm1044, %v1041, %v1043
        %1049 = vst [vmem:[#allocation2 + $0x80] sm:$0xf0] %v1045
        %1050 = vst [vmem:[#allocation2 + $0x88] sm:$0xf0] %v1046
        %1051 = vst [vmem:[#allocation1] ss:$2 sm:$0xff] %v532
        %s1052 = scalar_lea.vmem [#allocation1], 16
        %1053 = vst [vmem:[%s1052] ss:$2 sm:$0xff] %v533
        %v1054 = vld.sshfl [vmem:[#allocation1] sm:$0xff pattern:$0x75316420]
        %v1055 = vld.sshfl [vmem:[#allocation1 + $0x8] sm:$0xff pattern:$0x75316420]
        %v1056 = vld.sshfl [vmem:[#allocation1 + $0x10] sm:$0xff pattern:$0x75316420]
        %1057 = vrot.lane.b32.xlu0 %v1054, 79
        %v1058 = vpop.permute.xlu0 %1057
        %1059 = vrot.lane.b32.xlu0 %v1055, 79
        %v1060 = vpop.permute.xlu0 %1059
        %1061 = vrot.lane.b32.xlu0 %v1056, 79
        %v1062 = vpop.permute.xlu0 %1061
        %vm1063 = vcmask 646144
        %v1064 = vsel %vm1063, %v1058, %v1060
        %v1065 = vsel %vm1063, %v1060, %v1062
        %v1068 = vsel %vm714, %v1064, 0.0
        %v1069 = vsel %vm715, %v1065, 0.0
        %1070 = vst [vmem:[#allocation2 + $0x90] sm:$0xf] %v1068
        %1071 = vst [vmem:[#allocation2 + $0x98] sm:$0xf] %v1069
        %1072 = vst [vmem:[#allocation1] ss:$2 sm:$0xff] %v532
        %s1073 = scalar_lea.vmem [#allocation1], 16
        %1074 = vst [vmem:[%s1073] ss:$2 sm:$0xff] %v533
        %v1075 = vld.sshfl [vmem:[#allocation1] sm:$0xff pattern:$0x75316420]
        %v1076 = vld.sshfl [vmem:[#allocation1 + $0x8] sm:$0xff pattern:$0x75316420]
        %v1077 = vld.sshfl [vmem:[#allocation1 + $0x10] sm:$0xff pattern:$0x75316420]
        %1078 = vrot.lane.b32.xlu0 %v1075, 78
        %v1079 = vpop.permute.xlu0 %1078
        %1080 = vrot.lane.b32.xlu0 %v1076, 78
        %v1081 = vpop.permute.xlu0 %1080
        %1082 = vrot.lane.b32.xlu0 %v1077, 78
        %v1083 = vpop.permute.xlu0 %1082
        %vm1084 = vcmask 637952
        %v1085 = vsel %vm1084, %v1079, %v1081
        %v1086 = vsel %vm1084, %v1081, %v1083
        %v1089 = vsel %vm739, %v1085, 0.0
        %v1090 = vsel %vm740, %v1086, 0.0
        %v1093 = vrot.slane %v1089, 4
        %v1094 = vrot.slane %v1090, 4
        %1097 = vst [vmem:[#allocation2 + $0x90] sm:$0xf0] %v1093
        %1098 = vst [vmem:[#allocation2 + $0x98] sm:$0xf0] %v1094
        %1099 = vst [vmem:[#allocation1] ss:$2 sm:$0xff] %v532
        %s1100 = scalar_lea.vmem [#allocation1], 16
        %1101 = vst [vmem:[%s1100] ss:$2 sm:$0xff] %v533
        %v1102 = vld.sshfl [vmem:[#allocation1] sm:$0xff pattern:$0x75316420]
        %v1103 = vld.sshfl [vmem:[#allocation1 + $0x8] sm:$0xff pattern:$0x75316420]
        %v1104 = vld.sshfl [vmem:[#allocation1 + $0x10] sm:$0xff pattern:$0x75316420]
        %1105 = vrot.lane.b32.xlu0 %v1102, 77
        %v1106 = vpop.permute.xlu0 %1105
        %1107 = vrot.lane.b32.xlu0 %v1103, 77
        %v1108 = vpop.permute.xlu0 %1107
        %1109 = vrot.lane.b32.xlu0 %v1104, 77
        %v1110 = vpop.permute.xlu0 %1109
        %vm1111 = vcmask 629760
        %v1112 = vsel %vm1111, %v1106, %v1108
        %v1113 = vsel %vm1111, %v1108, %v1110
        %v1116 = vsel %vm770, %v1112, 0.0
        %v1117 = vsel %vm771, %v1113, 0.0
        %1118 = vst [vmem:[#allocation2 + $0xa0] sm:$0xf] %v1116
        %1119 = vst [vmem:[#allocation2 + $0xa8] sm:$0xf] %v1117
        %1120 = vst [vmem:[#allocation1] ss:$2 sm:$0xff] %v532
        %s1121 = scalar_lea.vmem [#allocation1], 16
        %1122 = vst [vmem:[%s1121] ss:$2 sm:$0xff] %v533
        %v1123 = vld.sshfl [vmem:[#allocation1] sm:$0xff pattern:$0x75316420]
        %v1124 = vld.sshfl [vmem:[#allocation1 + $0x8] sm:$0xff pattern:$0x75316420]
        %v1125 = vld.sshfl [vmem:[#allocation1 + $0x10] sm:$0xff pattern:$0x75316420]
        %1126 = vrot.lane.b32.xlu0 %v1123, 67
        %v1127 = vpop.permute.xlu0 %1126
        %1128 = vrot.lane.b32.xlu0 %v1124, 67
        %v1129 = vpop.permute.xlu0 %1128
        %1130 = vrot.lane.b32.xlu0 %v1125, 67
        %v1131 = vpop.permute.xlu0 %1130
        %vm1132 = vcmask 547840
        %v1133 = vsel %vm1132, %v1127, %v1129
        %v1134 = vsel %vm1132, %v1129, %v1131
        %v1137 = vsel %vm611, %v1133, 0.0
        %v1138 = vsel %vm612, %v1134, 0.0
        %v1141 = vrot.slane %v1137, 4
        %v1142 = vrot.slane %v1138, 4
        %1145 = vst [vmem:[#allocation2 + $0xa0] sm:$0xf0] %v1141
        %1146 = vst [vmem:[#allocation2 + $0xa8] sm:$0xf0] %v1142
        %1147 = vst [vmem:[#allocation1] ss:$2 sm:$0xff] %v532
        %s1148 = scalar_lea.vmem [#allocation1], 16
        %1149 = vst [vmem:[%s1148] ss:$2 sm:$0xff] %v533
        %v1150 = vld.sshfl [vmem:[#allocation1] sm:$0xff pattern:$0x75316420]
        %v1151 = vld.sshfl [vmem:[#allocation1 + $0x8] sm:$0xff pattern:$0x75316420]
        %v1152 = vld.sshfl [vmem:[#allocation1 + $0x10] sm:$0xff pattern:$0x75316420]
        %1153 = vrot.lane.b32.xlu0 %v1150, 66
        %v1154 = vpop.permute.xlu0 %1153
        %1155 = vrot.lane.b32.xlu0 %v1151, 66
        %v1156 = vpop.permute.xlu0 %1155
        %1157 = vrot.lane.b32.xlu0 %v1152, 66
        %v1158 = vpop.permute.xlu0 %1157
        %vm1159 = vcmask 539648
        %v1160 = vsel %vm1159, %v1154, %v1156
        %v1161 = vsel %vm1159, %v1156, %v1158
        %v1164 = vsel %vm638, %v1160, 0.0
        %v1165 = vsel %vm639, %v1161, 0.0
        %1166 = vst [vmem:[#allocation2 + $0xb0] sm:$0xf] %v1164
        %1167 = vst [vmem:[#allocation2 + $0xb8] sm:$0xf] %v1165
        %1168 = vst [vmem:[#allocation1] ss:$2 sm:$0xff] %v532
        %s1169 = scalar_lea.vmem [#allocation1], 16
        %1170 = vst [vmem:[%s1169] ss:$2 sm:$0xff] %v533
        %v1171 = vld.sshfl [vmem:[#allocation1] sm:$0xff pattern:$0x75316420]
        %v1172 = vld.sshfl [vmem:[#allocation1 + $0x8] sm:$0xff pattern:$0x75316420]
        %v1173 = vld.sshfl [vmem:[#allocation1 + $0x10] sm:$0xff pattern:$0x75316420]
        %1174 = vrot.lane.b32.xlu0 %v1171, 65
        %v1175 = vpop.permute.xlu0 %1174
        %1176 = vrot.lane.b32.xlu0 %v1172, 65
        %v1177 = vpop.permute.xlu0 %1176
        %1178 = vrot.lane.b32.xlu0 %v1173, 65
        %v1179 = vpop.permute.xlu0 %1178
        %vm1180 = vcmask 531456
        %v1181 = vsel %vm1180, %v1175, %v1177
        %v1182 = vsel %vm1180, %v1177, %v1179
        %v1185 = vsel %vm669, %v1181, 0.0
        %v1186 = vsel %vm670, %v1182, 0.0
        %v1189 = vrot.slane %v1185, 4
        %v1190 = vrot.slane %v1186, 4
        %1193 = vst [vmem:[#allocation2 + $0xb0] sm:$0xf0] %v1189
        %1194 = vst [vmem:[#allocation2 + $0xb8] sm:$0xf0] %v1190
        %1195 = vst [vmem:[#allocation1] ss:$2 sm:$0xff] %v532
        %s1196 = scalar_lea.vmem [#allocation1], 16
        %1197 = vst [vmem:[%s1196] ss:$2 sm:$0xff] %v533
        %v1198 = vld.sshfl [vmem:[#allocation1] sm:$0xff pattern:$0x75316420]
        %v1199 = vld.sshfl [vmem:[#allocation1 + $0x8] sm:$0xff pattern:$0x75316420]
        %v1200 = vld.sshfl [vmem:[#allocation1 + $0x10] sm:$0xff pattern:$0x75316420]
        %1201 = vrot.lane.b32.xlu0 %v1198, 64
        %v1202 = vpop.permute.xlu0 %1201
        %1203 = vrot.lane.b32.xlu0 %v1199, 64
        %v1204 = vpop.permute.xlu0 %1203
        %1205 = vrot.lane.b32.xlu0 %v1200, 64
        %v1206 = vpop.permute.xlu0 %1205
        %vm1207 = vcmask 523264
        %v1208 = vsel %vm1207, %v1202, %v1204
        %v1209 = vsel %vm1207, %v1204, %v1206
        %1212 = vst [vmem:[#allocation2 + $0xc0] sm:$0xf] %v1208
        %1213 = vst [vmem:[#allocation2 + $0xc8] sm:$0xf] %v1209
        %1214 = vst [vmem:[#allocation1] ss:$2 sm:$0xff] %v532
        %s1215 = scalar_lea.vmem [#allocation1], 16
        %1216 = vst [vmem:[%s1215] ss:$2 sm:$0xff] %v533
        %v1217 = vld.sshfl [vmem:[#allocation1] sm:$0xff pattern:$0x75316420]
        %v1218 = vld.sshfl [vmem:[#allocation1 + $0x8] sm:$0xff pattern:$0x75316420]
        %v1219 = vld.sshfl [vmem:[#allocation1 + $0x10] sm:$0xff pattern:$0x75316420]
        %1220 = vrot.lane.b32.xlu0 %v1217, 63
        %v1221 = vpop.permute.xlu0 %1220
        %1222 = vrot.lane.b32.xlu0 %v1218, 63
        %v1223 = vpop.permute.xlu0 %1222
        %1224 = vrot.lane.b32.xlu0 %v1219, 63
        %v1225 = vpop.permute.xlu0 %1224
        %vm1226 = vcmask 515072
        %v1227 = vsel %vm1226, %v1221, %v1223
        %v1228 = vsel %vm1226, %v1223, %v1225
        %v1231 = vsel %vm714, %v1227, 0.0
        %v1232 = vsel %vm715, %v1228, 0.0
        %v1235 = vrot.slane %v1231, 4
        %v1236 = vrot.slane %v1232, 4
        %1239 = vst [vmem:[#allocation2 + $0xc0] sm:$0xf0] %v1235
        %1240 = vst [vmem:[#allocation2 + $0xc8] sm:$0xf0] %v1236
        %1241 = vst [vmem:[#allocation1] ss:$2 sm:$0xff] %v532
        %s1242 = scalar_lea.vmem [#allocation1], 16
        %1243 = vst [vmem:[%s1242] ss:$2 sm:$0xff] %v533
        %v1244 = vld.sshfl [vmem:[#allocation1] sm:$0xff pattern:$0x75316420]
        %v1245 = vld.sshfl [vmem:[#allocation1 + $0x8] sm:$0xff pattern:$0x75316420]
        %v1246 = vld.sshfl [vmem:[#allocation1 + $0x10] sm:$0xff pattern:$0x75316420]
        %1247 = vrot.lane.b32.xlu0 %v1244, 62
        %v1248 = vpop.permute.xlu0 %1247
        %1249 = vrot.lane.b32.xlu0 %v1245, 62
        %v1250 = vpop.permute.xlu0 %1249
        %1251 = vrot.lane.b32.xlu0 %v1246, 62
        %v1252 = vpop.permute.xlu0 %1251
        %vm1253 = vcmask 506880
        %v1254 = vsel %vm1253, %v1248, %v1250
        %v1255 = vsel %vm1253, %v1250, %v1252
        %v1258 = vsel %vm739, %v1254, 0.0
        %v1259 = vsel %vm740, %v1255, 0.0
        %1260 = vst [vmem:[#allocation2 + $0xd0] sm:$0xf] %v1258
        %1261 = vst [vmem:[#allocation2 + $0xd8] sm:$0xf] %v1259
        %1262 = vst [vmem:[#allocation1] ss:$2 sm:$0xff] %v532
        %s1263 = scalar_lea.vmem [#allocation1], 16
        %1264 = vst [vmem:[%s1263] ss:$2 sm:$0xff] %v533
        %v1265 = vld.sshfl [vmem:[#allocation1] sm:$0xff pattern:$0x75316420]
        %v1266 = vld.sshfl [vmem:[#allocation1 + $0x8] sm:$0xff pattern:$0x75316420]
        %v1267 = vld.sshfl [vmem:[#allocation1 + $0x10] sm:$0xff pattern:$0x75316420]
        %1268 = vrot.lane.b32.xlu0 %v1265, 61
        %v1269 = vpop.permute.xlu0 %1268
        %1270 = vrot.lane.b32.xlu0 %v1266, 61
        %v1271 = vpop.permute.xlu0 %1270
        %1272 = vrot.lane.b32.xlu0 %v1267, 61
        %v1273 = vpop.permute.xlu0 %1272
        %vm1274 = vcmask 498688
        %v1275 = vsel %vm1274, %v1269, %v1271
        %v1276 = vsel %vm1274, %v1271, %v1273
        %v1279 = vsel %vm770, %v1275, 0.0
        %v1280 = vsel %vm771, %v1276, 0.0
        %v1283 = vrot.slane %v1279, 4
        %v1284 = vrot.slane %v1280, 4
        %1287 = vst [vmem:[#allocation2 + $0xd0] sm:$0xf0] %v1283
        %1288 = vst [vmem:[#allocation2 + $0xd8] sm:$0xf0] %v1284
        %1289 = vst [vmem:[#allocation1] ss:$2 sm:$0xff] %v532
        %s1290 = scalar_lea.vmem [#allocation1], 16
        %1291 = vst [vmem:[%s1290] ss:$2 sm:$0xff] %v533
        %v1292 = vld.sshfl [vmem:[#allocation1] sm:$0xff pattern:$0x75316420]
        %v1293 = vld.sshfl [vmem:[#allocation1 + $0x8] sm:$0xff pattern:$0x75316420]
        %v1294 = vld.sshfl [vmem:[#allocation1 + $0x10] sm:$0xff pattern:$0x75316420]
        %1295 = vrot.lane.b32.xlu0 %v1292, 51
        %v1296 = vpop.permute.xlu0 %1295
        %1297 = vrot.lane.b32.xlu0 %v1293, 51
        %v1298 = vpop.permute.xlu0 %1297
        %1299 = vrot.lane.b32.xlu0 %v1294, 51
        %v1300 = vpop.permute.xlu0 %1299
        %vm1301 = vcmask 416768
        %v1302 = vsel %vm1301, %v1296, %v1298
        %v1303 = vsel %vm1301, %v1298, %v1300
        %v1306 = vsel %vm611, %v1302, 0.0
        %v1307 = vsel %vm612, %v1303, 0.0
        %1308 = vst [vmem:[#allocation2 + $0xe0] sm:$0xf] %v1306
        %1309 = vst [vmem:[#allocation2 + $0xe8] sm:$0xf] %v1307
        %1310 = vst [vmem:[#allocation1] ss:$2 sm:$0xff] %v532
        %s1311 = scalar_lea.vmem [#allocation1], 16
        %1312 = vst [vmem:[%s1311] ss:$2 sm:$0xff] %v533
        %v1313 = vld.sshfl [vmem:[#allocation1] sm:$0xff pattern:$0x75316420]
        %v1314 = vld.sshfl [vmem:[#allocation1 + $0x8] sm:$0xff pattern:$0x75316420]
        %v1315 = vld.sshfl [vmem:[#allocation1 + $0x10] sm:$0xff pattern:$0x75316420]
        %1316 = vrot.lane.b32.xlu0 %v1313, 50
        %v1317 = vpop.permute.xlu0 %1316
        %1318 = vrot.lane.b32.xlu0 %v1314, 50
        %v1319 = vpop.permute.xlu0 %1318
        %1320 = vrot.lane.b32.xlu0 %v1315, 50
        %v1321 = vpop.permute.xlu0 %1320
        %vm1322 = vcmask 408576
        %v1323 = vsel %vm1322, %v1317, %v1319
        %v1324 = vsel %vm1322, %v1319, %v1321
        %v1327 = vsel %vm638, %v1323, 0.0
        %v1328 = vsel %vm639, %v1324, 0.0
        %v1331 = vrot.slane %v1327, 4
        %v1332 = vrot.slane %v1328, 4
        %1335 = vst [vmem:[#allocation2 + $0xe0] sm:$0xf0] %v1331
        %1336 = vst [vmem:[#allocation2 + $0xe8] sm:$0xf0] %v1332
        %1337 = vst [vmem:[#allocation1] ss:$2 sm:$0xff] %v532
        %s1338 = scalar_lea.vmem [#allocation1], 16
        %1339 = vst [vmem:[%s1338] ss:$2 sm:$0xff] %v533
        %v1340 = vld.sshfl [vmem:[#allocation1] sm:$0xff pattern:$0x75316420]
        %v1341 = vld.sshfl [vmem:[#allocation1 + $0x8] sm:$0xff pattern:$0x75316420]
        %v1342 = vld.sshfl [vmem:[#allocation1 + $0x10] sm:$0xff pattern:$0x75316420]
        %1343 = vrot.lane.b32.xlu0 %v1340, 49
        %v1344 = vpop.permute.xlu0 %1343
        %1345 = vrot.lane.b32.xlu0 %v1341, 49
        %v1346 = vpop.permute.xlu0 %1345
        %1347 = vrot.lane.b32.xlu0 %v1342, 49
        %v1348 = vpop.permute.xlu0 %1347
        %vm1349 = vcmask 400384
        %v1350 = vsel %vm1349, %v1344, %v1346
        %v1351 = vsel %vm1349, %v1346, %v1348
        %v1354 = vsel %vm669, %v1350, 0.0
        %v1355 = vsel %vm670, %v1351, 0.0
        %1356 = vst [vmem:[#allocation2 + $0xf0] sm:$0xf] %v1354
        %1357 = vst [vmem:[#allocation2 + $0xf8] sm:$0xf] %v1355
        %s1358 = scalar_lea.vmem [#allocation1], 1
        %1359 = vst [vmem:[%s1358] ss:$2 sm:$0xff] %v532
        %s1360 = scalar_lea.vmem [#allocation1], 17
        %1361 = vst [vmem:[%s1360] ss:$2 sm:$0xff] %v533
        %v1362 = vld.sshfl [vmem:[#allocation1] sm:$0xff pattern:$0x75316420]
        %v1363 = vld.sshfl [vmem:[#allocation1 + $0x8] sm:$0xff pattern:$0x75316420]
        %v1364 = vld.sshfl [vmem:[#allocation1 + $0x10] sm:$0xff pattern:$0x75316420]
        %1365 = vrot.lane.b32.xlu0 %v1362, 48
        %v1366 = vpop.permute.xlu0 %1365
        %1367 = vrot.lane.b32.xlu0 %v1363, 48
        %v1368 = vpop.permute.xlu0 %1367
        %1369 = vrot.lane.b32.xlu0 %v1364, 48
        %v1370 = vpop.permute.xlu0 %1369
        %vm1371 = vcmask 392192
        %v1372 = vsel %vm1371, %v1366, %v1368
        %v1373 = vsel %vm1371, %v1368, %v1370
        %1376 = vst [vmem:[#allocation2 + $0xf0] sm:$0xf0] %v1372
        %1377 = vst [vmem:[#allocation2 + $0xf8] sm:$0xf0] %v1373
        %1378 = vst [vmem:[#allocation1] ss:$2 sm:$0xff] %v532
        %s1379 = scalar_lea.vmem [#allocation1], 16
        %1380 = vst [vmem:[%s1379] ss:$2 sm:$0xff] %v533
        %v1381 = vld.sshfl [vmem:[#allocation1] sm:$0xff pattern:$0x75316420]
        %v1382 = vld.sshfl [vmem:[#allocation1 + $0x8] sm:$0xff pattern:$0x75316420]
        %v1383 = vld.sshfl [vmem:[#allocation1 + $0x10] sm:$0xff pattern:$0x75316420]
        %1384 = vrot.lane.b32.xlu0 %v1381, 47
        %v1385 = vpop.permute.xlu0 %1384
        %1386 = vrot.lane.b32.xlu0 %v1382, 47
        %v1387 = vpop.permute.xlu0 %1386
        %1388 = vrot.lane.b32.xlu0 %v1383, 47
        %v1389 = vpop.permute.xlu0 %1388
        %vm1390 = vcmask 384000
        %v1391 = vsel %vm1390, %v1385, %v1387
        %v1392 = vsel %vm1390, %v1387, %v1389
        %v1395 = vsel %vm714, %v1391, 0.0
        %v1396 = vsel %vm715, %v1392, 0.0
        %1397 = vst [vmem:[#allocation2 + $0x100] sm:$0xf] %v1395
        %1398 = vst [vmem:[#allocation2 + $0x108] sm:$0xf] %v1396
        %1399 = vst [vmem:[#allocation1] ss:$2 sm:$0xff] %v532
        %s1400 = scalar_lea.vmem [#allocation1], 16
        %1401 = vst [vmem:[%s1400] ss:$2 sm:$0xff] %v533
        %v1402 = vld.sshfl [vmem:[#allocation1] sm:$0xff pattern:$0x75316420]
        %v1403 = vld.sshfl [vmem:[#allocation1 + $0x8] sm:$0xff pattern:$0x75316420]
        %v1404 = vld.sshfl [vmem:[#allocation1 + $0x10] sm:$0xff pattern:$0x75316420]
        %1405 = vrot.lane.b32.xlu0 %v1402, 46
        %v1406 = vpop.permute.xlu0 %1405
        %1407 = vrot.lane.b32.xlu0 %v1403, 46
        %v1408 = vpop.permute.xlu0 %1407
        %1409 = vrot.lane.b32.xlu0 %v1404, 46
        %v1410 = vpop.permute.xlu0 %1409
        %vm1411 = vcmask 375808
        %v1412 = vsel %vm1411, %v1406, %v1408
        %v1413 = vsel %vm1411, %v1408, %v1410
        %v1416 = vsel %vm739, %v1412, 0.0
        %v1417 = vsel %vm740, %v1413, 0.0
        %v1420 = vrot.slane %v1416, 4
        %v1421 = vrot.slane %v1417, 4
        %1424 = vst [vmem:[#allocation2 + $0x100] sm:$0xf0] %v1420
        %1425 = vst [vmem:[#allocation2 + $0x108] sm:$0xf0] %v1421
        %1426 = vst [vmem:[#allocation1] ss:$2 sm:$0xff] %v532
        %s1427 = scalar_lea.vmem [#allocation1], 16
        %1428 = vst [vmem:[%s1427] ss:$2 sm:$0xff] %v533
        %v1429 = vld.sshfl [vmem:[#allocation1] sm:$0xff pattern:$0x75316420]
        %v1430 = vld.sshfl [vmem:[#allocation1 + $0x8] sm:$0xff pattern:$0x75316420]
        %v1431 = vld.sshfl [vmem:[#allocation1 + $0x10] sm:$0xff pattern:$0x75316420]
        %1432 = vrot.lane.b32.xlu0 %v1429, 45
        %v1433 = vpop.permute.xlu0 %1432
        %1434 = vrot.lane.b32.xlu0 %v1430, 45
        %v1435 = vpop.permute.xlu0 %1434
        %1436 = vrot.lane.b32.xlu0 %v1431, 45
        %v1437 = vpop.permute.xlu0 %1436
        %vm1438 = vcmask 367616
        %v1439 = vsel %vm1438, %v1433, %v1435
        %v1440 = vsel %vm1438, %v1435, %v1437
        %v1443 = vsel %vm770, %v1439, 0.0
        %v1444 = vsel %vm771, %v1440, 0.0
        %1445 = vst [vmem:[#allocation2 + $0x110] sm:$0xf] %v1443
        %1446 = vst [vmem:[#allocation2 + $0x118] sm:$0xf] %v1444
        %1447 = vst [vmem:[#allocation1] ss:$2 sm:$0xff] %v532
        %s1448 = scalar_lea.vmem [#allocation1], 16
        %1449 = vst [vmem:[%s1448] ss:$2 sm:$0xff] %v533
        %v1450 = vld.sshfl [vmem:[#allocation1] sm:$0xff pattern:$0x75316420]
        %v1451 = vld.sshfl [vmem:[#allocation1 + $0x8] sm:$0xff pattern:$0x75316420]
        %v1452 = vld.sshfl [vmem:[#allocation1 + $0x10] sm:$0xff pattern:$0x75316420]
        %1453 = vrot.lane.b32.xlu0 %v1450, 35
        %v1454 = vpop.permute.xlu0 %1453
        %1455 = vrot.lane.b32.xlu0 %v1451, 35
        %v1456 = vpop.permute.xlu0 %1455
        %1457 = vrot.lane.b32.xlu0 %v1452, 35
        %v1458 = vpop.permute.xlu0 %1457
        %vm1459 = vcmask 285696
        %v1460 = vsel %vm1459, %v1454, %v1456
        %v1461 = vsel %vm1459, %v1456, %v1458
        %v1464 = vsel %vm611, %v1460, 0.0
        %v1465 = vsel %vm612, %v1461, 0.0
        %v1468 = vrot.slane %v1464, 4
        %v1469 = vrot.slane %v1465, 4
        %1472 = vst [vmem:[#allocation2 + $0x110] sm:$0xf0] %v1468
        %1473 = vst [vmem:[#allocation2 + $0x118] sm:$0xf0] %v1469
        %1474 = vst [vmem:[#allocation1] ss:$2 sm:$0xff] %v532
        %s1475 = scalar_lea.vmem [#allocation1], 16
        %1476 = vst [vmem:[%s1475] ss:$2 sm:$0xff] %v533
        %v1477 = vld.sshfl [vmem:[#allocation1] sm:$0xff pattern:$0x75316420]
        %v1478 = vld.sshfl [vmem:[#allocation1 + $0x8] sm:$0xff pattern:$0x75316420]
        %v1479 = vld.sshfl [vmem:[#allocation1 + $0x10] sm:$0xff pattern:$0x75316420]
        %1480 = vrot.lane.b32.xlu0 %v1477, 34
        %v1481 = vpop.permute.xlu0 %1480
        %1482 = vrot.lane.b32.xlu0 %v1478, 34
        %v1483 = vpop.permute.xlu0 %1482
        %1484 = vrot.lane.b32.xlu0 %v1479, 34
        %v1485 = vpop.permute.xlu0 %1484
        %vm1486 = vcmask 277504
        %v1487 = vsel %vm1486, %v1481, %v1483
        %v1488 = vsel %vm1486, %v1483, %v1485
        %v1491 = vsel %vm638, %v1487, 0.0
        %v1492 = vsel %vm639, %v1488, 0.0
        %1493 = vst [vmem:[#allocation2 + $0x120] sm:$0xf] %v1491
        %1494 = vst [vmem:[#allocation2 + $0x128] sm:$0xf] %v1492
        %1495 = vst [vmem:[#allocation1] ss:$2 sm:$0xff] %v532
        %s1496 = scalar_lea.vmem [#allocation1], 16
        %1497 = vst [vmem:[%s1496] ss:$2 sm:$0xff] %v533
        %v1498 = vld.sshfl [vmem:[#allocation1] sm:$0xff pattern:$0x75316420]
        %v1499 = vld.sshfl [vmem:[#allocation1 + $0x8] sm:$0xff pattern:$0x75316420]
        %v1500 = vld.sshfl [vmem:[#allocation1 + $0x10] sm:$0xff pattern:$0x75316420]
        %1501 = vrot.lane.b32.xlu0 %v1498, 33
        %v1502 = vpop.permute.xlu0 %1501
        %1503 = vrot.lane.b32.xlu0 %v1499, 33
        %v1504 = vpop.permute.xlu0 %1503
        %1505 = vrot.lane.b32.xlu0 %v1500, 33
        %v1506 = vpop.permute.xlu0 %1505
        %vm1507 = vcmask 269312
        %v1508 = vsel %vm1507, %v1502, %v1504
        %v1509 = vsel %vm1507, %v1504, %v1506
        %v1512 = vsel %vm669, %v1508, 0.0
        %v1513 = vsel %vm670, %v1509, 0.0
        %v1516 = vrot.slane %v1512, 4
        %v1517 = vrot.slane %v1513, 4
        %1520 = vst [vmem:[#allocation2 + $0x120] sm:$0xf0] %v1516
        %1521 = vst [vmem:[#allocation2 + $0x128] sm:$0xf0] %v1517
        %1522 = vst [vmem:[#allocation1] ss:$2 sm:$0xff] %v532
        %s1523 = scalar_lea.vmem [#allocation1], 16
        %1524 = vst [vmem:[%s1523] ss:$2 sm:$0xff] %v533
        %v1525 = vld.sshfl [vmem:[#allocation1] sm:$0xff pattern:$0x75316420]
        %v1526 = vld.sshfl [vmem:[#allocation1 + $0x8] sm:$0xff pattern:$0x75316420]
        %v1527 = vld.sshfl [vmem:[#allocation1 + $0x10] sm:$0xff pattern:$0x75316420]
        %1528 = vrot.lane.b32.xlu0 %v1525, 32
        %v1529 = vpop.permute.xlu0 %1528
        %1530 = vrot.lane.b32.xlu0 %v1526, 32
        %v1531 = vpop.permute.xlu0 %1530
        %1532 = vrot.lane.b32.xlu0 %v1527, 32
        %v1533 = vpop.permute.xlu0 %1532
        %vm1534 = vcmask 261120
        %v1535 = vsel %vm1534, %v1529, %v1531
        %v1536 = vsel %vm1534, %v1531, %v1533
        %1539 = vst [vmem:[#allocation2 + $0x130] sm:$0xf] %v1535
        %1540 = vst [vmem:[#allocation2 + $0x138] sm:$0xf] %v1536
        %1541 = vst [vmem:[#allocation1] ss:$2 sm:$0xff] %v532
        %s1542 = scalar_lea.vmem [#allocation1], 16
        %1543 = vst [vmem:[%s1542] ss:$2 sm:$0xff] %v533
        %v1544 = vld.sshfl [vmem:[#allocation1] sm:$0xff pattern:$0x75316420]
        %v1545 = vld.sshfl [vmem:[#allocation1 + $0x8] sm:$0xff pattern:$0x75316420]
        %v1546 = vld.sshfl [vmem:[#allocation1 + $0x10] sm:$0xff pattern:$0x75316420]
        %1547 = vrot.lane.b32.xlu0 %v1544, 31
        %v1548 = vpop.permute.xlu0 %1547
        %1549 = vrot.lane.b32.xlu0 %v1545, 31
        %v1550 = vpop.permute.xlu0 %1549
        %1551 = vrot.lane.b32.xlu0 %v1546, 31
        %v1552 = vpop.permute.xlu0 %1551
        %vm1553 = vcmask 252928
        %v1554 = vsel %vm1553, %v1548, %v1550
        %v1555 = vsel %vm1553, %v1550, %v1552
        %v1558 = vsel %vm714, %v1554, 0.0
        %v1559 = vsel %vm715, %v1555, 0.0
        %v1562 = vrot.slane %v1558, 4
        %v1563 = vrot.slane %v1559, 4
        %1566 = vst [vmem:[#allocation2 + $0x130] sm:$0xf0] %v1562
        %1567 = vst [vmem:[#allocation2 + $0x138] sm:$0xf0] %v1563
        %1568 = vst [vmem:[#allocation1] ss:$2 sm:$0xff] %v532
        %s1569 = scalar_lea.vmem [#allocation1], 16
        %1570 = vst [vmem:[%s1569] ss:$2 sm:$0xff] %v533
        %v1571 = vld.sshfl [vmem:[#allocation1] sm:$0xff pattern:$0x75316420]
        %v1572 = vld.sshfl [vmem:[#allocation1 + $0x8] sm:$0xff pattern:$0x75316420]
        %v1573 = vld.sshfl [vmem:[#allocation1 + $0x10] sm:$0xff pattern:$0x75316420]
        %1574 = vrot.lane.b32.xlu0 %v1571, 30
        %v1575 = vpop.permute.xlu0 %1574
        %1576 = vrot.lane.b32.xlu0 %v1572, 30
        %v1577 = vpop.permute.xlu0 %1576
        %1578 = vrot.lane.b32.xlu0 %v1573, 30
        %v1579 = vpop.permute.xlu0 %1578
        %vm1580 = vcmask 244736
        %v1581 = vsel %vm1580, %v1575, %v1577
        %v1582 = vsel %vm1580, %v1577, %v1579
        %v1585 = vsel %vm739, %v1581, 0.0
        %v1586 = vsel %vm740, %v1582, 0.0
        %1587 = vst [vmem:[#allocation2 + $0x140] sm:$0xf] %v1585
        %1588 = vst [vmem:[#allocation2 + $0x148] sm:$0xf] %v1586
        %1589 = vst [vmem:[#allocation1] ss:$2 sm:$0xff] %v532
        %s1590 = scalar_lea.vmem [#allocation1], 16
        %1591 = vst [vmem:[%s1590] ss:$2 sm:$0xff] %v533
        %v1592 = vld.sshfl [vmem:[#allocation1] sm:$0xff pattern:$0x75316420]
        %v1593 = vld.sshfl [vmem:[#allocation1 + $0x8] sm:$0xff pattern:$0x75316420]
        %v1594 = vld.sshfl [vmem:[#allocation1 + $0x10] sm:$0xff pattern:$0x75316420]
        %1595 = vrot.lane.b32.xlu0 %v1592, 29
        %v1596 = vpop.permute.xlu0 %1595
        %1597 = vrot.lane.b32.xlu0 %v1593, 29
        %v1598 = vpop.permute.xlu0 %1597
        %1599 = vrot.lane.b32.xlu0 %v1594, 29
        %v1600 = vpop.permute.xlu0 %1599
        %vm1601 = vcmask 236544
        %v1602 = vsel %vm1601, %v1596, %v1598
        %v1603 = vsel %vm1601, %v1598, %v1600
        %v1606 = vsel %vm770, %v1602, 0.0
        %v1607 = vsel %vm771, %v1603, 0.0
        %v1610 = vrot.slane %v1606, 4
        %v1611 = vrot.slane %v1607, 4
        %1614 = vst [vmem:[#allocation2 + $0x140] sm:$0xf0] %v1610
        %1615 = vst [vmem:[#allocation2 + $0x148] sm:$0xf0] %v1611
        %1616 = vst [vmem:[#allocation1] ss:$2 sm:$0xff] %v532
        %s1617 = scalar_lea.vmem [#allocation1], 16
        %1618 = vst [vmem:[%s1617] ss:$2 sm:$0xff] %v533
        %v1619 = vld.sshfl [vmem:[#allocation1] sm:$0xff pattern:$0x75316420]
        %v1620 = vld.sshfl [vmem:[#allocation1 + $0x8] sm:$0xff pattern:$0x75316420]
        %v1621 = vld.sshfl [vmem:[#allocation1 + $0x10] sm:$0xff pattern:$0x75316420]
        %1622 = vrot.lane.b32.xlu0 %v1619, 19
        %v1623 = vpop.permute.xlu0 %1622
        %1624 = vrot.lane.b32.xlu0 %v1620, 19
        %v1625 = vpop.permute.xlu0 %1624
        %1626 = vrot.lane.b32.xlu0 %v1621, 19
        %v1627 = vpop.permute.xlu0 %1626
        %vm1628 = vcmask 154624
        %v1629 = vsel %vm1628, %v1623, %v1625
        %v1630 = vsel %vm1628, %v1625, %v1627
        %v1633 = vsel %vm611, %v1629, 0.0
        %v1634 = vsel %vm612, %v1630, 0.0
        %1635 = vst [vmem:[#allocation2 + $0x150] sm:$0xf] %v1633
        %1636 = vst [vmem:[#allocation2 + $0x158] sm:$0xf] %v1634
        %1637 = vst [vmem:[#allocation1] ss:$2 sm:$0xff] %v532
        %s1638 = scalar_lea.vmem [#allocation1], 16
        %1639 = vst [vmem:[%s1638] ss:$2 sm:$0xff] %v533
        %v1640 = vld.sshfl [vmem:[#allocation1] sm:$0xff pattern:$0x75316420]
        %v1641 = vld.sshfl [vmem:[#allocation1 + $0x8] sm:$0xff pattern:$0x75316420]
        %v1642 = vld.sshfl [vmem:[#allocation1 + $0x10] sm:$0xff pattern:$0x75316420]
        %1643 = vrot.lane.b32.xlu0 %v1640, 18
        %v1644 = vpop.permute.xlu0 %1643
        %1645 = vrot.lane.b32.xlu0 %v1641, 18
        %v1646 = vpop.permute.xlu0 %1645
        %1647 = vrot.lane.b32.xlu0 %v1642, 18
        %v1648 = vpop.permute.xlu0 %1647
        %vm1649 = vcmask 146432
        %v1650 = vsel %vm1649, %v1644, %v1646
        %v1651 = vsel %vm1649, %v1646, %v1648
        %v1654 = vsel %vm638, %v1650, 0.0
        %v1655 = vsel %vm639, %v1651, 0.0
        %v1658 = vrot.slane %v1654, 4
        %v1659 = vrot.slane %v1655, 4
        %1662 = vst [vmem:[#allocation2 + $0x150] sm:$0xf0] %v1658
        %1663 = vst [vmem:[#allocation2 + $0x158] sm:$0xf0] %v1659
        %1664 = vst [vmem:[#allocation1] ss:$2 sm:$0xff] %v532
        %s1665 = scalar_lea.vmem [#allocation1], 16
        %1666 = vst [vmem:[%s1665] ss:$2 sm:$0xff] %v533
        %v1667 = vld.sshfl [vmem:[#allocation1] sm:$0xff pattern:$0x75316420]
        %v1668 = vld.sshfl [vmem:[#allocation1 + $0x8] sm:$0xff pattern:$0x75316420]
        %v1669 = vld.sshfl [vmem:[#allocation1 + $0x10] sm:$0xff pattern:$0x75316420]
        %1670 = vrot.lane.b32.xlu0 %v1667, 17
        %v1671 = vpop.permute.xlu0 %1670
        %1672 = vrot.lane.b32.xlu0 %v1668, 17
        %v1673 = vpop.permute.xlu0 %1672
        %1674 = vrot.lane.b32.xlu0 %v1669, 17
        %v1675 = vpop.permute.xlu0 %1674
        %vm1676 = vcmask 138240
        %v1677 = vsel %vm1676, %v1671, %v1673
        %v1678 = vsel %vm1676, %v1673, %v1675
        %v1681 = vsel %vm669, %v1677, 0.0
        %v1682 = vsel %vm670, %v1678, 0.0
        %1683 = vst [vmem:[#allocation2 + $0x160] sm:$0xf] %v1681
        %1684 = vst [vmem:[#allocation2 + $0x168] sm:$0xf] %v1682
        %s1685 = scalar_lea.vmem [#allocation1], 1
        %1686 = vst [vmem:[%s1685] ss:$2 sm:$0xff] %v532
        %s1687 = scalar_lea.vmem [#allocation1], 17
        %1688 = vst [vmem:[%s1687] ss:$2 sm:$0xff] %v533
        %v1689 = vld.sshfl [vmem:[#allocation1] sm:$0xff pattern:$0x75316420]
        %v1690 = vld.sshfl [vmem:[#allocation1 + $0x8] sm:$0xff pattern:$0x75316420]
        %v1691 = vld.sshfl [vmem:[#allocation1 + $0x10] sm:$0xff pattern:$0x75316420]
        %1692 = vrot.lane.b32.xlu0 %v1689, 16
        %v1693 = vpop.permute.xlu0 %1692
        %1694 = vrot.lane.b32.xlu0 %v1690, 16
        %v1695 = vpop.permute.xlu0 %1694
        %1696 = vrot.lane.b32.xlu0 %v1691, 16
        %v1697 = vpop.permute.xlu0 %1696
        %vm1698 = vcmask 130048
        %v1699 = vsel %vm1698, %v1693, %v1695
        %v1700 = vsel %vm1698, %v1695, %v1697
        %1703 = vst [vmem:[#allocation2 + $0x160] sm:$0xf0] %v1699
        %1704 = vst [vmem:[#allocation2 + $0x168] sm:$0xf0] %v1700
        %1705 = vst [vmem:[#allocation1] ss:$2 sm:$0xff] %v532
        %s1706 = scalar_lea.vmem [#allocation1], 16
        %1707 = vst [vmem:[%s1706] ss:$2 sm:$0xff] %v533
        %v1708 = vld.sshfl [vmem:[#allocation1] sm:$0xff pattern:$0x75316420]
        %v1709 = vld.sshfl [vmem:[#allocation1 + $0x8] sm:$0xff pattern:$0x75316420]
        %v1710 = vld.sshfl [vmem:[#allocation1 + $0x10] sm:$0xff pattern:$0x75316420]
        %1711 = vrot.lane.b32.xlu0 %v1708, 15
        %v1712 = vpop.permute.xlu0 %1711
        %1713 = vrot.lane.b32.xlu0 %v1709, 15
        %v1714 = vpop.permute.xlu0 %1713
        %1715 = vrot.lane.b32.xlu0 %v1710, 15
        %v1716 = vpop.permute.xlu0 %1715
        %vm1717 = vcmask 121856
        %v1718 = vsel %vm1717, %v1712, %v1714
        %v1719 = vsel %vm1717, %v1714, %v1716
        %v1722 = vsel %vm714, %v1718, 0.0
        %v1723 = vsel %vm715, %v1719, 0.0
        %1724 = vst [vmem:[#allocation2 + $0x170] sm:$0xf] %v1722
        %1725 = vst [vmem:[#allocation2 + $0x178] sm:$0xf] %v1723
        %1726 = vst [vmem:[#allocation1] ss:$2 sm:$0xff] %v532
        %s1727 = scalar_lea.vmem [#allocation1], 16
        %1728 = vst [vmem:[%s1727] ss:$2 sm:$0xff] %v533
        %v1729 = vld.sshfl [vmem:[#allocation1] sm:$0xff pattern:$0x75316420]
        %v1730 = vld.sshfl [vmem:[#allocation1 + $0x8] sm:$0xff pattern:$0x75316420]
        %v1731 = vld.sshfl [vmem:[#allocation1 + $0x10] sm:$0xff pattern:$0x75316420]
        %1732 = vrot.lane.b32.xlu0 %v1729, 14
        %v1733 = vpop.permute.xlu0 %1732
        %1734 = vrot.lane.b32.xlu0 %v1730, 14
        %v1735 = vpop.permute.xlu0 %1734
        %1736 = vrot.lane.b32.xlu0 %v1731, 14
        %v1737 = vpop.permute.xlu0 %1736
        %vm1738 = vcmask 113664
        %v1739 = vsel %vm1738, %v1733, %v1735
        %v1740 = vsel %vm1738, %v1735, %v1737
        %v1743 = vsel %vm739, %v1739, 0.0
        %v1744 = vsel %vm740, %v1740, 0.0
        %v1747 = vrot.slane %v1743, 4
        %v1748 = vrot.slane %v1744, 4
        %1751 = vst [vmem:[#allocation2 + $0x170] sm:$0xf0] %v1747
        %1752 = vst [vmem:[#allocation2 + $0x178] sm:$0xf0] %v1748
        %1753 = vst [vmem:[#allocation1] ss:$2 sm:$0xff] %v532
        %s1754 = scalar_lea.vmem [#allocation1], 16
        %1755 = vst [vmem:[%s1754] ss:$2 sm:$0xff] %v533
        %v1756 = vld.sshfl [vmem:[#allocation1] sm:$0xff pattern:$0x75316420]
        %v1757 = vld.sshfl [vmem:[#allocation1 + $0x8] sm:$0xff pattern:$0x75316420]
        %v1758 = vld.sshfl [vmem:[#allocation1 + $0x10] sm:$0xff pattern:$0x75316420]
        %1759 = vrot.lane.b32.xlu0 %v1756, 13
        %v1760 = vpop.permute.xlu0 %1759
        %1761 = vrot.lane.b32.xlu0 %v1757, 13
        %v1762 = vpop.permute.xlu0 %1761
        %1763 = vrot.lane.b32.xlu0 %v1758, 13
        %v1764 = vpop.permute.xlu0 %1763
        %vm1765 = vcmask 105472
        %v1766 = vsel %vm1765, %v1760, %v1762
        %v1767 = vsel %vm1765, %v1762, %v1764
        %v1770 = vsel %vm770, %v1766, 0.0
        %v1771 = vsel %vm771, %v1767, 0.0
        %1772 = vst [vmem:[#allocation2 + $0x180] sm:$0xf] %v1770
        %1773 = vst [vmem:[#allocation2 + $0x188] sm:$0xf] %v1771
        %v1774 = vld [vmem:[#allocation2] sm:$0xff]
        %v1775 = vld [vmem:[#allocation2 + $0x8] sm:$0xff]
        %v1776 = vld [vmem:[#allocation2 + $0x10] sm:$0xff]
        %v1777 = vld [vmem:[#allocation2 + $0x18] sm:$0xff]
        %v1778 = vld [vmem:[#allocation2 + $0x20] sm:$0xff]
        %v1779 = vld [vmem:[#allocation2 + $0x28] sm:$0xff]
        %v1780 = vld [vmem:[#allocation2 + $0x30] sm:$0xff]
        %v1781 = vld [vmem:[#allocation2 + $0x38] sm:$0xff]
        %v1782 = vld [vmem:[#allocation2 + $0x40] sm:$0xff]
        %v1783 = vld [vmem:[#allocation2 + $0x48] sm:$0xff]
        %v1784 = vld [vmem:[#allocation2 + $0x50] sm:$0xff]
        %v1785 = vld [vmem:[#allocation2 + $0x58] sm:$0xff]
        %v1786 = vld [vmem:[#allocation2 + $0x60] sm:$0xff]
        %v1787 = vld [vmem:[#allocation2 + $0x68] sm:$0xff]
        %v1788 = vld [vmem:[#allocation2 + $0x70] sm:$0xff]
        %v1789 = vld [vmem:[#allocation2 + $0x78] sm:$0xff]
        %v1790 = vld [vmem:[#allocation2 + $0x80] sm:$0xff]
        %v1791 = vld [vmem:[#allocation2 + $0x88] sm:$0xff]
        %v1792 = vld [vmem:[#allocation2 + $0x90] sm:$0xff]
        %v1793 = vld [vmem:[#allocation2 + $0x98] sm:$0xff]
        %v1794 = vld [vmem:[#allocation2 + $0xa0] sm:$0xff]
        %v1795 = vld [vmem:[#allocation2 + $0xa8] sm:$0xff]
        %v1796 = vld [vmem:[#allocation2 + $0xb0] sm:$0xff]
        %v1797 = vld [vmem:[#allocation2 + $0xb8] sm:$0xff]
        %v1798 = vld [vmem:[#allocation2 + $0xc0] sm:$0xff]
        %v1799 = vld [vmem:[#allocation2 + $0xc8] sm:$0xff]
        %v1800 = vld [vmem:[#allocation2 + $0xd0] sm:$0xff]
        %v1801 = vld [vmem:[#allocation2 + $0xd8] sm:$0xff]
        %v1802 = vld [vmem:[#allocation2 + $0xe0] sm:$0xff]
        %v1803 = vld [vmem:[#allocation2 + $0xe8] sm:$0xff]
        %v1804 = vld [vmem:[#allocation2 + $0xf0] sm:$0xff]
        %v1805 = vld [vmem:[#allocation2 + $0xf8] sm:$0xff]
        %v1806 = vld [vmem:[#allocation2 + $0x100] sm:$0xff]
        %v1807 = vld [vmem:[#allocation2 + $0x108] sm:$0xff]
        %v1808 = vld [vmem:[#allocation2 + $0x110] sm:$0xff]
        %v1809 = vld [vmem:[#allocation2 + $0x118] sm:$0xff]
        %v1810 = vld [vmem:[#allocation2 + $0x120] sm:$0xff]
        %v1811 = vld [vmem:[#allocation2 + $0x128] sm:$0xff]
        %v1812 = vld [vmem:[#allocation2 + $0x130] sm:$0xff]
        %v1813 = vld [vmem:[#allocation2 + $0x138] sm:$0xff]
        %v1814 = vld [vmem:[#allocation2 + $0x140] sm:$0xff]
        %v1815 = vld [vmem:[#allocation2 + $0x148] sm:$0xff]
        %v1816 = vld [vmem:[#allocation2 + $0x150] sm:$0xff]
        %v1817 = vld [vmem:[#allocation2 + $0x158] sm:$0xff]
        %v1818 = vld [vmem:[#allocation2 + $0x160] sm:$0xff]
        %v1819 = vld [vmem:[#allocation2 + $0x168] sm:$0xff]
        %v1820 = vld [vmem:[#allocation2 + $0x170] sm:$0xff]
        %v1821 = vld [vmem:[#allocation2 + $0x178] sm:$0xff]
        %v1822 = vld [vmem:[#allocation2 + $0x180] sm:$0xf]
        %v1823 = vld [vmem:[#allocation2 + $0x188] sm:$0xf]
        %v1825 = vsel %vm289, %v531, 0
        %vm1827 = vcmask 1043456
        %v1829 = vsel %vm1827, %v1822, 0
        %v1832 = vsel %vm1827, %v1823, 0
        %1834 = vmatpush.msra.mxu0 %v1804
        %1835 = vmatpush.msra.mxu0 %v1802
        %1836 = vmatpush.msra.mxu0 %v1800
        %1837 = vmatpush.msra.mxu0 %v1798
        %1838 = vmatpush.msra.mxu0 %v1796
        %1839 = vmatpush.msra.mxu0 %v1794
        %1840 = vmatpush.msra.mxu0 %v1792
        %1841 = vmatpush.msra.mxu0 %v1790
        %1842 = vmatpush.msra.mxu0 %v1788
        %1843 = vmatpush.msra.mxu0 %v1786
        %1844 = vmatpush.msra.mxu0 %v1784
        %1845 = vmatpush.msra.mxu0 %v1782
        %1846 = vmatpush.msra.mxu0 %v1780
        %1847 = vmatpush.msra.mxu0 %v1778
        %1848 = vmatpush.msra.mxu0 %v1776
        %1849 = vmatpush.msra.mxu0 %v1774
        %1850 = vmatmul.f32.gmra.mxu0 %v530
        %v1851 = vpop.f32.mrf.mxu0
        %v1852 = vadd.f32 0.0, %v1851
        %1853 = vdwg.mxu0
        %1854 = vmatpush.msra.mxu0 0.0
        %1855 = vmatpush.msra.mxu0 0.0
        %1856 = vmatpush.msra.mxu0 0.0
        %1857 = vmatpush.msra.mxu0 0.0
        %1858 = vmatpush.msra.mxu0 0.0
        %1859 = vmatpush.msra.mxu0 0.0
        %1860 = vmatpush.msra.mxu0 0.0
        %1861 = vmatpush.msra.mxu0 %v1829
        %1862 = vmatpush.msra.mxu0 %v1820
        %1863 = vmatpush.msra.mxu0 %v1818
        %1864 = vmatpush.msra.mxu0 %v1816
        %1865 = vmatpush.msra.mxu0 %v1814
        %1866 = vmatpush.msra.mxu0 %v1812
        %1867 = vmatpush.msra.mxu0 %v1810
        %1868 = vmatpush.msra.mxu0 %v1808
        %1869 = vmatpush.msra.mxu0 %v1806
        %1870 = vmatmul.f32.gmra.mxu0 %v1825
        %v1871 = vpop.f32.mrf.mxu0
        %v1872 = vadd.f32 %v1852, %v1871
        %1873 = vdwg.mxu0
        %1874 = vmatpush.msra.mxu0 %v1805
        %1875 = vmatpush.msra.mxu0 %v1803
        %1876 = vmatpush.msra.mxu0 %v1801
        %1877 = vmatpush.msra.mxu0 %v1799
        %1878 = vmatpush.msra.mxu0 %v1797
        %1879 = vmatpush.msra.mxu0 %v1795
        %1880 = vmatpush.msra.mxu0 %v1793
        %1881 = vmatpush.msra.mxu0 %v1791
        %1882 = vmatpush.msra.mxu0 %v1789
        %1883 = vmatpush.msra.mxu0 %v1787
        %1884 = vmatpush.msra.mxu0 %v1785
        %1885 = vmatpush.msra.mxu0 %v1783
        %1886 = vmatpush.msra.mxu0 %v1781
        %1887 = vmatpush.msra.mxu0 %v1779
        %1888 = vmatpush.msra.mxu0 %v1777
        %1889 = vmatpush.msra.mxu0 %v1775
        %1890 = vmatmul.f32.gmra.mxu0 %v530
        %v1891 = vpop.f32.mrf.mxu0
        %v1892 = vadd.f32 0.0, %v1891
        %1893 = vdwg.mxu0
        %1894 = vmatpush.msra.mxu0 0.0
        %1895 = vmatpush.msra.mxu0 0.0
        %1896 = vmatpush.msra.mxu0 0.0
        %1897 = vmatpush.msra.mxu0 0.0
        %1898 = vmatpush.msra.mxu0 0.0
        %1899 = vmatpush.msra.mxu0 0.0
        %1900 = vmatpush.msra.mxu0 0.0
        %1901 = vmatpush.msra.mxu0 %v1832
        %1902 = vmatpush.msra.mxu0 %v1821
        %1903 = vmatpush.msra.mxu0 %v1819
        %1904 = vmatpush.msra.mxu0 %v1817
        %1905 = vmatpush.msra.mxu0 %v1815
        %1906 = vmatpush.msra.mxu0 %v1813
        %1907 = vmatpush.msra.mxu0 %v1811
        %1908 = vmatpush.msra.mxu0 %v1809
        %1909 = vmatpush.msra.mxu0 %v1807
        %1910 = vmatmul.f32.gmra.mxu0 %v1825
        %v1911 = vpop.f32.mrf.mxu0
        %v1912 = vadd.f32 %v1892, %v1911
        %1913 = vdwg.mxu0
        %1914 = vst [vmem:[%s284] sm:$0xff] %v1872
        %1915 = vst [vmem:[%s284 + $0x8] sm:$0xff] %v1912
        %s1916 = sand.u32 %s163, 1
        %s1917 = scalar_lea.sflag [#allocation5], %s1916
        %s1918 = sand.u32 %s163, 1
        %s1919 = smul.addr %s1918, 16
        %s1920 = scalar_lea.vmem [#allocation8], %s1919
        // Predicated region
        $region53: #{tpu_custom_call.1} parent=43 // pred_check
          %p1921 = pneg %p173
        $region54: #{tpu_custom_call.1} parent=43 // pred_check_branch
          %1923 = sbr.rel (%p1921) target = $region56
        $region55: #{tpu_custom_call.1} parent=43 // pred_region
          %1925 = vsyncadd %s1917, 0
          %s1926 = smul.addr %s24, 2
          %s1927 = smul.addr %s1926, 8
          %s1928 = scalar_lea.hbm %s6, %s1927
          %s1930 = sshll.u32 %s1920, 4
          %s1931 = int_to_ptr.vmem [resolvable:$true] %s1930
          %s1932 = sshll.u32 %s1928, 4
          %s1933 = int_to_ptr.hbm [resolvable:$true] %s1932
          %1935 = dma.vmem_to_hbm [thread:$0]  %s1931, 256, %s1933, %s1917
        $region56: #{tpu_custom_call.1} parent=43 // pred_fallthru
          _
      $region44: #{tpu_custom_call.1} parent=5 // pred_fallthru
        _
      %p1936 = scmp.le.s32.totalorder 2, %s19
      // Predicated region
      $region57: #{tpu_custom_call.1} parent=5 // pred_check
        %p1937 = pneg %p1936
      $region58: #{tpu_custom_call.1} parent=5 // pred_check_branch
        %1939 = sbr.rel (%p1937) target = $region60
      $region59: #{tpu_custom_call.1} parent=5 // pred_region
        %s1940 = ssub.s32 %s19, 2
        // Predicated region
        $region61: #{tpu_custom_call.1} parent=59 // pred_check
          %p1941 = pneg %p179
        $region62: #{tpu_custom_call.1} parent=59 // pred_check_branch
          %1943 = sbr.rel (%p1941) target = $region64
        $region63: #{tpu_custom_call.1} parent=59 // pred_region
          %s1944 = sand.u32 %s164, 1
          %s1945 = scalar_lea.sflag [#allocation5], %s1944
          %s1946 = sand.u32 %s164, 1
          %s1947 = smul.addr %s1946, 16
          %s1948 = scalar_lea.vmem [#allocation8], %s1947
          %1950 = dma.done %s1945, 256
        $region64: #{tpu_custom_call.1} parent=59 // pred_fallthru
          _
      $region60: #{tpu_custom_call.1} parent=5 // pred_fallthru
        _
    $region6: #{tpu_custom_call.1} parent=1 // loop_footer
      %s23 = sadd.s32 1, %s19
    $region7: #{tpu_custom_call.1} parent=1 // loop_footer_branch
      %18 = sbr.rel target = $region3
    $region8: #{tpu_custom_call.1} parent=1 // loop_exit
      _
    %1951 = vsyncpa [#allocation4], 1
    %s1952 = scalar_lea.sflag [#allocation4], 1
    %1953 = vsyncpa %s1952, 1
    %1954 = vsyncpa [#allocation7], 1
    %1955 = vsyncpa [#allocation5], 1
    %s1956 = scalar_lea.sflag [#allocation5], 1
    %1957 = vsyncpa %s1956, 1

</llo_original>
